<compile_context>
chip_gen: v7x
topology: tpu7x:2x2x1
jax: 0.10.0
libtpu: 0.0.40
codegen_flags: <defaults>
</compile_context>

<pallas_src>
import jax
import jax.numpy as jnp
import numpy as np
from jax.experimental import pallas as pl
from jax.experimental.pallas import tpu as pltpu


def attention_kernel(x_ref, w_ref, b_ref, out_ref):
    # x_ref : (Bt, T, H)  VMEM
    # w_ref : (1, H)      VMEM  (lane-major attention weight)
    # b_ref : (1, 1)      SMEM  (scalar bias)
    # out_ref: (Bt, H)    VMEM
    _, T, _ = x_ref.shape
    w = w_ref[...]                                          # (1, H)
    b = b_ref[0, 0]                                         # scalar

    # Scores: VPU broadcast-multiply + lane reduction over H -> lane-dense (Bt, T).
    scores = jnp.sum(x_ref[...] * w[:, None, :], axis=-1) + b   # (Bt, T)

    # Numerically-stable softmax over time; exact division for PyTorch parity.
    m = jnp.max(scores, axis=1, keepdims=True)              # (Bt, 1)
    e = jnp.exp(scores - m)                                 # (Bt, T)
    denom = jnp.sum(e, axis=1, keepdims=True)               # (Bt, 1)
    weights = e / denom                                     # (Bt, T)

    # Weighted sum over time as a short static accumulation: one (Bt, H) slice
    # is loaded from VMEM per step, only the (Bt, H) accumulator stays live.
    acc = x_ref[:, 0, :] * weights[:, 0:1]                  # (Bt, H)
    for t in range(1, T):
        acc = acc + x_ref[:, t, :] * weights[:, t:t + 1]
    out_ref[...] = acc.astype(out_ref.dtype)


def attention_module(x, w, b, *, bt=256):
    """x: (B, T, H) float32; w: (1, H) lane-major Linear weight; b: (1, 1).

    Returns attended output of shape (B, H).
    """
    B, T, H = x.shape
    # Keep >=2 grid steps when B allows so "parallel" can shard batch tiles
    # across both TensorCores on v7x; never exceed B.
    if B >= 2:
        bt = min(bt, pl.cdiv(B, 2))
    bt = max(1, min(bt, B))
    grid = (pl.cdiv(B, bt),)
    return pl.pallas_call(
        attention_kernel,
        out_shape=jax.ShapeDtypeStruct((B, H), x.dtype),
        grid=grid,
        in_specs=[
            # Stream x over the batch axis; (T, H) stay full (lane-dense H).
            pl.BlockSpec((bt, T, H), lambda i: (i, 0, 0)),
            # Small weight vector, same block every step.
            pl.BlockSpec((1, H), lambda i: (0, 0)),
            # Scalar bias in SMEM.
            pl.BlockSpec(memory_space=pltpu.MemorySpace.SMEM),
        ],
        out_specs=pl.BlockSpec((bt, H), lambda i: (i, 0)),
        compiler_params=pltpu.CompilerParams(
            dimension_semantics=("parallel",),   # shard batch tiles across TCs (v7x)
            vmem_limit_bytes=48 * 1024 * 1024,   # fits v7x's 64 MiB VMEM with headroom
        ),
    )(x, w, b)


def attention_module_ref(x, w, b):
    """Pure-JAX reference matching the PyTorch forward."""
    scores = jnp.einsum("bth,oh->bto", x, w) + b[None, :, :]    # (B, T, 1)
    weights = jax.nn.softmax(scores[..., 0], axis=1)[..., None]
    return jnp.sum(x * weights, axis=1)


if __name__ == "__main__":
    # hidden_size = 128 per the module spec; small B/T for the demo.
    B, T, H = 16, 16, 128

    key = jax.random.PRNGKey(0)
    kx, kw, kb = jax.random.split(key, 3)

    x = jax.random.normal(kx, (B, T, H), dtype=jnp.float32)

    # Deterministic nn.Linear(H, 1)-style init: U(-1/sqrt(H), 1/sqrt(H)).
    bound = 1.0 / np.sqrt(H)
    w = jax.random.uniform(kw, (1, H), jnp.float32, -bound, bound)   # lane-major
    b = jax.random.uniform(kb, (1, 1), jnp.float32, -bound, bound)

    out = attention_module(x, w, b)
    out = jax.block_until_ready(out)

    ref = attention_module_ref(x, w, b)
    assert out.shape == (B, H)
    np.testing.assert_allclose(np.asarray(out), np.asarray(ref),
                               rtol=1e-4, atol=1e-4)
    print("KERNEL_OK")
</pallas_src>

<mosaic_0001>
module attributes {stable_mosaic.version = 11 : i64} {
  func.func @attention_kernel(%arg0: i32, %arg1: memref<8x16x128xf32, #tpu.memory_space<vmem>>, %arg2: memref<1x128xf32, #tpu.memory_space<vmem>>, %arg3: memref<1x1xf32, #tpu.memory_space<smem>>, %arg4: memref<8x128xf32, #tpu.memory_space<vmem>>) attributes {dimension_semantics = [#tpu.dimension_semantics<parallel>], iteration_bounds = array<i64: 2>, scalar_prefetch = 0 : i64, scratch_operands = 0 : i64, tpu.core_type = #tpu.core_type<tc>, window_params = [{transform_indices = @transform_0, window_bounds = array<i64: 8, 16, 128>}, {pipeline_mode = #tpu.pipeline_mode<synchronous>, transform_indices = @transform_1, window_bounds = array<i64: 1, 128>}, {transform_indices = @transform_2, window_bounds = array<i64: 1, 1>}, {transform_indices = @transform_3, window_bounds = array<i64: 8, 128>}]} {
    %c0 = arith.constant 0 : index
    %c0_0 = arith.constant 0 : index
    %0 = vector.load %arg2[%c0, %c0_0] : memref<1x128xf32, #tpu.memory_space<vmem>>, vector<1x128xf32>
    %c0_1 = arith.constant 0 : index
    %c0_2 = arith.constant 0 : index
    %1 = memref.load %arg3[%c0_1, %c0_2] : memref<1x1xf32, #tpu.memory_space<smem>>
    %c0_3 = arith.constant 0 : index
    %c0_4 = arith.constant 0 : index
    %c0_5 = arith.constant 0 : index
    %2 = vector.load %arg1[%c0_3, %c0_4, %c0_5] : memref<8x16x128xf32, #tpu.memory_space<vmem>>, vector<8x16x128xf32>
    %3 = vector.shape_cast %0 : vector<1x128xf32> to vector<1x1x128xf32>
    %4 = vector.broadcast %3 : vector<1x1x128xf32> to vector<8x16x128xf32>
    %5 = arith.mulf %2, %4 : vector<8x16x128xf32>
    %cst = arith.constant dense<0.000000e+00> : vector<8x16xf32>
    %6 = vector.multi_reduction <add>, %5, %cst [2] : vector<8x16x128xf32> to vector<8x16xf32>
    %7 = vector.broadcast %1 : f32 to vector<8x16xf32>
    %8 = arith.addf %6, %7 : vector<8x16xf32>
    %cst_6 = arith.constant dense<0xFF800000> : vector<8xf32>
    %9 = vector.multi_reduction <maximumf>, %8, %cst_6 [1] : vector<8x16xf32> to vector<8xf32>
    %10 = vector.shape_cast %9 : vector<8xf32> to vector<8x1xf32>
    %11 = vector.broadcast %10 : vector<8x1xf32> to vector<8x16xf32>
    %12 = arith.subf %8, %11 : vector<8x16xf32>
    %13 = math.exp %12 : vector<8x16xf32>
    %cst_7 = arith.constant dense<0.000000e+00> : vector<8xf32>
    %14 = vector.multi_reduction <add>, %13, %cst_7 [1] : vector<8x16xf32> to vector<8xf32>
    %15 = vector.shape_cast %14 : vector<8xf32> to vector<8x1xf32>
    %16 = vector.broadcast %15 : vector<8x1xf32> to vector<8x16xf32>
    %17 = arith.divf %13, %16 : vector<8x16xf32>
    %c0_8 = arith.constant 0 : index
    %c0_9 = arith.constant 0 : index
    %c0_10 = arith.constant 0 : index
    %18 = vector.load %arg1[%c0_8, %c0_9, %c0_10] : memref<8x16x128xf32, #tpu.memory_space<vmem>>, vector<8x1x128xf32>
    %19 = vector.shape_cast %18 : vector<8x1x128xf32> to vector<8x128xf32>
    %20 = vector.extract_strided_slice %17 {offsets = [0, 0], sizes = [8, 1], strides = [1, 1]} : vector<8x16xf32> to vector<8x1xf32>
    %21 = vector.broadcast %20 : vector<8x1xf32> to vector<8x128xf32>
    %22 = arith.mulf %19, %21 : vector<8x128xf32>
    %c0_11 = arith.constant 0 : index
    %c1 = arith.constant 1 : index
    %c0_12 = arith.constant 0 : index
    %23 = vector.load %arg1[%c0_11, %c1, %c0_12] : memref<8x16x128xf32, #tpu.memory_space<vmem>>, vector<8x1x128xf32>
    %24 = vector.shape_cast %23 : vector<8x1x128xf32> to vector<8x128xf32>
    %25 = vector.extract_strided_slice %17 {offsets = [0, 1], sizes = [8, 1], strides = [1, 1]} : vector<8x16xf32> to vector<8x1xf32>
    %26 = vector.broadcast %25 : vector<8x1xf32> to vector<8x128xf32>
    %27 = arith.mulf %24, %26 : vector<8x128xf32>
    %28 = arith.addf %22, %27 : vector<8x128xf32>
    %c0_13 = arith.constant 0 : index
    %c2 = arith.constant 2 : index
    %c0_14 = arith.constant 0 : index
    %29 = vector.load %arg1[%c0_13, %c2, %c0_14] : memref<8x16x128xf32, #tpu.memory_space<vmem>>, vector<8x1x128xf32>
    %30 = vector.shape_cast %29 : vector<8x1x128xf32> to vector<8x128xf32>
    %31 = vector.extract_strided_slice %17 {offsets = [0, 2], sizes = [8, 1], strides = [1, 1]} : vector<8x16xf32> to vector<8x1xf32>
    %32 = vector.broadcast %31 : vector<8x1xf32> to vector<8x128xf32>
    %33 = arith.mulf %30, %32 : vector<8x128xf32>
    %34 = arith.addf %28, %33 : vector<8x128xf32>
    %c0_15 = arith.constant 0 : index
    %c3 = arith.constant 3 : index
    %c0_16 = arith.constant 0 : index
    %35 = vector.load %arg1[%c0_15, %c3, %c0_16] : memref<8x16x128xf32, #tpu.memory_space<vmem>>, vector<8x1x128xf32>
    %36 = vector.shape_cast %35 : vector<8x1x128xf32> to vector<8x128xf32>
    %37 = vector.extract_strided_slice %17 {offsets = [0, 3], sizes = [8, 1], strides = [1, 1]} : vector<8x16xf32> to vector<8x1xf32>
    %38 = vector.broadcast %37 : vector<8x1xf32> to vector<8x128xf32>
    %39 = arith.mulf %36, %38 : vector<8x128xf32>
    %40 = arith.addf %34, %39 : vector<8x128xf32>
    %c0_17 = arith.constant 0 : index
    %c4 = arith.constant 4 : index
    %c0_18 = arith.constant 0 : index
    %41 = vector.load %arg1[%c0_17, %c4, %c0_18] : memref<8x16x128xf32, #tpu.memory_space<vmem>>, vector<8x1x128xf32>
    %42 = vector.shape_cast %41 : vector<8x1x128xf32> to vector<8x128xf32>
    %43 = vector.extract_strided_slice %17 {offsets = [0, 4], sizes = [8, 1], strides = [1, 1]} : vector<8x16xf32> to vector<8x1xf32>
    %44 = vector.broadcast %43 : vector<8x1xf32> to vector<8x128xf32>
    %45 = arith.mulf %42, %44 : vector<8x128xf32>
    %46 = arith.addf %40, %45 : vector<8x128xf32>
    %c0_19 = arith.constant 0 : index
    %c5 = arith.constant 5 : index
    %c0_20 = arith.constant 0 : index
    %47 = vector.load %arg1[%c0_19, %c5, %c0_20] : memref<8x16x128xf32, #tpu.memory_space<vmem>>, vector<8x1x128xf32>
    %48 = vector.shape_cast %47 : vector<8x1x128xf32> to vector<8x128xf32>
    %49 = vector.extract_strided_slice %17 {offsets = [0, 5], sizes = [8, 1], strides = [1, 1]} : vector<8x16xf32> to vector<8x1xf32>
    %50 = vector.broadcast %49 : vector<8x1xf32> to vector<8x128xf32>
    %51 = arith.mulf %48, %50 : vector<8x128xf32>
    %52 = arith.addf %46, %51 : vector<8x128xf32>
    %c0_21 = arith.constant 0 : index
    %c6 = arith.constant 6 : index
    %c0_22 = arith.constant 0 : index
    %53 = vector.load %arg1[%c0_21, %c6, %c0_22] : memref<8x16x128xf32, #tpu.memory_space<vmem>>, vector<8x1x128xf32>
    %54 = vector.shape_cast %53 : vector<8x1x128xf32> to vector<8x128xf32>
    %55 = vector.extract_strided_slice %17 {offsets = [0, 6], sizes = [8, 1], strides = [1, 1]} : vector<8x16xf32> to vector<8x1xf32>
    %56 = vector.broadcast %55 : vector<8x1xf32> to vector<8x128xf32>
    %57 = arith.mulf %54, %56 : vector<8x128xf32>
    %58 = arith.addf %52, %57 : vector<8x128xf32>
    %c0_23 = arith.constant 0 : index
    %c7 = arith.constant 7 : index
    %c0_24 = arith.constant 0 : index
    %59 = vector.load %arg1[%c0_23, %c7, %c0_24] : memref<8x16x128xf32, #tpu.memory_space<vmem>>, vector<8x1x128xf32>
    %60 = vector.shape_cast %59 : vector<8x1x128xf32> to vector<8x128xf32>
    %61 = vector.extract_strided_slice %17 {offsets = [0, 7], sizes = [8, 1], strides = [1, 1]} : vector<8x16xf32> to vector<8x1xf32>
    %62 = vector.broadcast %61 : vector<8x1xf32> to vector<8x128xf32>
    %63 = arith.mulf %60, %62 : vector<8x128xf32>
    %64 = arith.addf %58, %63 : vector<8x128xf32>
    %c0_25 = arith.constant 0 : index
    %c8 = arith.constant 8 : index
    %c0_26 = arith.constant 0 : index
    %65 = vector.load %arg1[%c0_25, %c8, %c0_26] : memref<8x16x128xf32, #tpu.memory_space<vmem>>, vector<8x1x128xf32>
    %66 = vector.shape_cast %65 : vector<8x1x128xf32> to vector<8x128xf32>
    %67 = vector.extract_strided_slice %17 {offsets = [0, 8], sizes = [8, 1], strides = [1, 1]} : vector<8x16xf32> to vector<8x1xf32>
    %68 = vector.broadcast %67 : vector<8x1xf32> to vector<8x128xf32>
    %69 = arith.mulf %66, %68 : vector<8x128xf32>
    %70 = arith.addf %64, %69 : vector<8x128xf32>
    %c0_27 = arith.constant 0 : index
    %c9 = arith.constant 9 : index
    %c0_28 = arith.constant 0 : index
    %71 = vector.load %arg1[%c0_27, %c9, %c0_28] : memref<8x16x128xf32, #tpu.memory_space<vmem>>, vector<8x1x128xf32>
    %72 = vector.shape_cast %71 : vector<8x1x128xf32> to vector<8x128xf32>
    %73 = vector.extract_strided_slice %17 {offsets = [0, 9], sizes = [8, 1], strides = [1, 1]} : vector<8x16xf32> to vector<8x1xf32>
    %74 = vector.broadcast %73 : vector<8x1xf32> to vector<8x128xf32>
    %75 = arith.mulf %72, %74 : vector<8x128xf32>
    %76 = arith.addf %70, %75 : vector<8x128xf32>
    %c0_29 = arith.constant 0 : index
    %c10 = arith.constant 10 : index
    %c0_30 = arith.constant 0 : index
    %77 = vector.load %arg1[%c0_29, %c10, %c0_30] : memref<8x16x128xf32, #tpu.memory_space<vmem>>, vector<8x1x128xf32>
    %78 = vector.shape_cast %77 : vector<8x1x128xf32> to vector<8x128xf32>
    %79 = vector.extract_strided_slice %17 {offsets = [0, 10], sizes = [8, 1], strides = [1, 1]} : vector<8x16xf32> to vector<8x1xf32>
    %80 = vector.broadcast %79 : vector<8x1xf32> to vector<8x128xf32>
    %81 = arith.mulf %78, %80 : vector<8x128xf32>
    %82 = arith.addf %76, %81 : vector<8x128xf32>
    %c0_31 = arith.constant 0 : index
    %c11 = arith.constant 11 : index
    %c0_32 = arith.constant 0 : index
    %83 = vector.load %arg1[%c0_31, %c11, %c0_32] : memref<8x16x128xf32, #tpu.memory_space<vmem>>, vector<8x1x128xf32>
    %84 = vector.shape_cast %83 : vector<8x1x128xf32> to vector<8x128xf32>
    %85 = vector.extract_strided_slice %17 {offsets = [0, 11], sizes = [8, 1], strides = [1, 1]} : vector<8x16xf32> to vector<8x1xf32>
    %86 = vector.broadcast %85 : vector<8x1xf32> to vector<8x128xf32>
    %87 = arith.mulf %84, %86 : vector<8x128xf32>
    %88 = arith.addf %82, %87 : vector<8x128xf32>
    %c0_33 = arith.constant 0 : index
    %c12 = arith.constant 12 : index
    %c0_34 = arith.constant 0 : index
    %89 = vector.load %arg1[%c0_33, %c12, %c0_34] : memref<8x16x128xf32, #tpu.memory_space<vmem>>, vector<8x1x128xf32>
    %90 = vector.shape_cast %89 : vector<8x1x128xf32> to vector<8x128xf32>
    %91 = vector.extract_strided_slice %17 {offsets = [0, 12], sizes = [8, 1], strides = [1, 1]} : vector<8x16xf32> to vector<8x1xf32>
    %92 = vector.broadcast %91 : vector<8x1xf32> to vector<8x128xf32>
    %93 = arith.mulf %90, %92 : vector<8x128xf32>
    %94 = arith.addf %88, %93 : vector<8x128xf32>
    %c0_35 = arith.constant 0 : index
    %c13 = arith.constant 13 : index
    %c0_36 = arith.constant 0 : index
    %95 = vector.load %arg1[%c0_35, %c13, %c0_36] : memref<8x16x128xf32, #tpu.memory_space<vmem>>, vector<8x1x128xf32>
    %96 = vector.shape_cast %95 : vector<8x1x128xf32> to vector<8x128xf32>
    %97 = vector.extract_strided_slice %17 {offsets = [0, 13], sizes = [8, 1], strides = [1, 1]} : vector<8x16xf32> to vector<8x1xf32>
    %98 = vector.broadcast %97 : vector<8x1xf32> to vector<8x128xf32>
    %99 = arith.mulf %96, %98 : vector<8x128xf32>
    %100 = arith.addf %94, %99 : vector<8x128xf32>
    %c0_37 = arith.constant 0 : index
    %c14 = arith.constant 14 : index
    %c0_38 = arith.constant 0 : index
    %101 = vector.load %arg1[%c0_37, %c14, %c0_38] : memref<8x16x128xf32, #tpu.memory_space<vmem>>, vector<8x1x128xf32>
    %102 = vector.shape_cast %101 : vector<8x1x128xf32> to vector<8x128xf32>
    %103 = vector.extract_strided_slice %17 {offsets = [0, 14], sizes = [8, 1], strides = [1, 1]} : vector<8x16xf32> to vector<8x1xf32>
    %104 = vector.broadcast %103 : vector<8x1xf32> to vector<8x128xf32>
    %105 = arith.mulf %102, %104 : vector<8x128xf32>
    %106 = arith.addf %100, %105 : vector<8x128xf32>
    %c0_39 = arith.constant 0 : index
    %c15 = arith.constant 15 : index
    %c0_40 = arith.constant 0 : index
    %107 = vector.load %arg1[%c0_39, %c15, %c0_40] : memref<8x16x128xf32, #tpu.memory_space<vmem>>, vector<8x1x128xf32>
    %108 = vector.shape_cast %107 : vector<8x1x128xf32> to vector<8x128xf32>
    %109 = vector.extract_strided_slice %17 {offsets = [0, 15], sizes = [8, 1], strides = [1, 1]} : vector<8x16xf32> to vector<8x1xf32>
    %110 = vector.broadcast %109 : vector<8x1xf32> to vector<8x128xf32>
    %111 = arith.mulf %108, %110 : vector<8x128xf32>
    %112 = arith.addf %106, %111 : vector<8x128xf32>
    %c0_41 = arith.constant 0 : index
    %c0_42 = arith.constant 0 : index
    %113 = vector.load %arg4[%c0_41, %c0_42] : memref<8x128xf32, #tpu.memory_space<vmem>>, vector<8x128xf32>
    tpu.vector_store %arg4[%c0_41, %c0_42], %112 {strides = array<i32>} : memref<8x128xf32, #tpu.memory_space<vmem>>, vector<8x128xf32>,
    return
  }
  func.func @transform_0(%arg0: i32) -> (i32, i32, i32) {
    %c0_i32 = arith.constant 0 : i32
    %c0_i32_0 = arith.constant 0 : i32
    %c0_i32_1 = arith.constant 0 : i32
    return %arg0, %c0_i32, %c0_i32_0 : i32, i32, i32
  }
  func.func @transform_1(%arg0: i32) -> (i32, i32) {
    %c0_i32 = arith.constant 0 : i32
    %c0_i32_0 = arith.constant 0 : i32
    %c0_i32_1 = arith.constant 0 : i32
    return %c0_i32, %c0_i32_0 : i32, i32
  }
  func.func @transform_2(%arg0: i32) -> (i32, i32) {
    %c0_i32 = arith.constant 0 : i32
    %c0_i32_0 = arith.constant 0 : i32
    %c0_i32_1 = arith.constant 0 : i32
    return %c0_i32, %c0_i32_0 : i32, i32
  }
  func.func @transform_3(%arg0: i32) -> (i32, i32) {
    %c0_i32 = arith.constant 0 : i32
    %c0_i32_0 = arith.constant 0 : i32
    return %arg0, %c0_i32 : i32, i32
  }
}

</mosaic_0001>

<llo_original>
// kernel: tpu_custom_call.1
$region0: #{tpu_custom_call.1}
  #allocation0 [shape = 'u32[]', space=smem, size = 0x4, offset = 0x4, fixed_abs, tag = 'smem constant byte address 0x4 - core index']
  #allocation1 [shape = 'u32[144,128]{1,0:T(1,128)}', space=vmem, size = 0x12000, scoped, tag = 'internal scratch']
  #allocation2 [shape = 'f32[1,1]{1,0:T(1,128)S(6)}', space=smem, size = 0x200, scoped, tag = 'scoped memory for tpu_custom_call.1']
  %s0 = inlined_call_operand.hbm [shape: f32[16,16,128], index: 0, kind: input, shape index: {}]
  %s1 = inlined_call_operand.vmem [shape: f32[1,128], index: 1, kind: input, shape index: {}]
  %s2 = inlined_call_operand.<no memory space> [shape: f32[1,1], index: 2, kind: input, shape index: {}]
  %s3 = inlined_call_operand.hbm [shape: f32[16,128], index: 3, kind: output, shape index: {}]
  %s4 = sld [smem:[#allocation0]]
  $region49: #{tpu_custom_call.1} parent=0
    _
  %s6 = ssub.s32 1, %s4
  %s7 = scalar_select 0, %s6, %s4
  %8 = sst [smem:[#allocation2]] %s2
  $region1: #{tpu_custom_call.1} parent=0
    #allocation3 [shape = 'u8[131072]{0}', space=vmem, size = 0x20000, scoped, tag = 'input window, operand 0']
    #allocation4 [shape = 's32[2]{0}', space=sflag, size = 0x8, scoped, tag = 'scoped memory for tpu_custom_call.1']
    #allocation5 [shape = 's32[2]{0}', space=sflag, size = 0x8, scoped, tag = 'scoped memory for tpu_custom_call.1']
    #allocation6 [shape = 'u8[8192]{0}', space=vmem, size = 0x2000, scoped, tag = 'output window, operand 0']
    %9 = vsyncpa [#allocation4], 0
    %s10 = scalar_lea.sflag [#allocation4], 1
    %11 = vsyncpa %s10, 0
    %12 = vsyncpa [#allocation5], 0
    %s13 = scalar_lea.sflag [#allocation5], 1
    %14 = vsyncpa %s13, 0
    loop: start=0, step=1, limit=4
    $region2: #{tpu_custom_call.1} parent=1 // loop_pre_header
      _
    $region3: #{tpu_custom_call.1} parent=1 // loop_header
      %s16 = sphi 0, %s20
      %p17 = scmp.ge.s32.totalorder %s16, 4
      %s26 = sphi 0, %s28
      %s29 = sphi 0, %s26
      %s30 = sphi 0, %s29
      %s46 = sphi 0, %s30
      %s50 = sphi 0, %s50
      %s52 = sphi 0, %s50
      %s53 = sphi 0, %s52
      %s67 = sphi 0, %s53
      %s71 = sphi 0, %s71
      %s73 = sphi 0, %s71
      %s74 = sphi 0, %s73
      %s88 = sphi 0, %s74
      %s94 = sphi 0, %s96
      %s97 = sphi 0, %s94
      %s98 = sphi 0, %s97
      %s114 = sphi 0, %s98
    $region4: #{tpu_custom_call.1} parent=1 // loop_header_branch
      %19 = sbr.rel (%p17) target = $region8
    $region5: #{tpu_custom_call.1} parent=1 // loop_body
      %s21 = ssub.s32 %s16, 1
      %s22 = ssub.s32 %s16, 2
      %s23 = sadd.s32 %s16, 1
      %s24 = ssub.s32 %s16, %s23
      %p25 = scmp.eq.s32.totalorder %s24, 0
      %s27 = sadd.s32 %s26, 1
      %s28 = scalar_select %p25, %s26, %s27
      %p31 = pneg %p25
      %p32 = scmp.eq.s32.totalorder %s16, 1
      %p33 = por %p31, %p32
      %p34 = scmp.ne.s32.totalorder %s26, %s29
      %p35 = scmp.eq.s32.totalorder %s16, 0
      %p36 = por %p34, %p35
      %p37 = scmp.ne.s32.totalorder %s26, %s29
      %p38 = scmp.eq.s32.totalorder %s21, 1
      %p39 = por %p37, %p38
      %p40 = scmp.ne.s32.totalorder %s29, %s30
      %p41 = scmp.eq.s32.totalorder %s21, 0
      %p42 = por %p40, %p41
      %p43 = scmp.ne.s32.totalorder %s29, %s30
      %p44 = scmp.eq.s32.totalorder %s22, 1
      %p45 = por %p43, %p44
      %p47 = scmp.ne.s32.totalorder %s30, %s46
      %p48 = scmp.eq.s32.totalorder %s22, 0
      %p49 = por %p47, %p48
      %s51 = sadd.s32 %s50, 1
      %p54 = scmp.eq.s32.totalorder %s16, 1
      %p55 = scmp.ne.s32.totalorder %s50, %s52
      %p56 = scmp.eq.s32.totalorder %s16, 0
      %p57 = por %p55, %p56
      %p58 = scmp.ne.s32.totalorder %s50, %s52
      %p59 = scmp.eq.s32.totalorder %s21, 1
      %p60 = por %p58, %p59
      %p61 = scmp.ne.s32.totalorder %s52, %s53
      %p62 = scmp.eq.s32.totalorder %s21, 0
      %p63 = por %p61, %p62
      %p64 = scmp.ne.s32.totalorder %s52, %s53
      %p65 = scmp.eq.s32.totalorder %s22, 1
      %p66 = por %p64, %p65
      %p68 = scmp.ne.s32.totalorder %s53, %s67
      %p69 = scmp.eq.s32.totalorder %s22, 0
      %p70 = por %p68, %p69
      %s72 = sadd.s32 %s71, 1
      %p75 = scmp.eq.s32.totalorder %s16, 1
      %p76 = scmp.ne.s32.totalorder %s71, %s73
      %p77 = scmp.eq.s32.totalorder %s16, 0
      %p78 = por %p76, %p77
      %p79 = scmp.ne.s32.totalorder %s71, %s73
      %p80 = scmp.eq.s32.totalorder %s21, 1
      %p81 = por %p79, %p80
      %p82 = scmp.ne.s32.totalorder %s73, %s74
      %p83 = scmp.eq.s32.totalorder %s21, 0
      %p84 = por %p82, %p83
      %p85 = scmp.ne.s32.totalorder %s73, %s74
      %p86 = scmp.eq.s32.totalorder %s22, 1
      %p87 = por %p85, %p86
      %p89 = scmp.ne.s32.totalorder %s74, %s88
      %p90 = scmp.eq.s32.totalorder %s22, 0
      %p91 = por %p89, %p90
      %s92 = ssub.s32 %s16, %s23
      %p93 = scmp.eq.s32.totalorder %s92, 0
      %s95 = sadd.s32 %s94, 1
      %s96 = scalar_select %p93, %s94, %s95
      %p99 = pneg %p93
      %p100 = scmp.eq.s32.totalorder %s16, 1
      %p101 = por %p99, %p100
      %p102 = scmp.ne.s32.totalorder %s94, %s97
      %p103 = scmp.eq.s32.totalorder %s16, 0
      %p104 = por %p102, %p103
      %p105 = scmp.ne.s32.totalorder %s94, %s97
      %p106 = scmp.eq.s32.totalorder %s21, 1
      %p107 = por %p105, %p106
      %p108 = scmp.ne.s32.totalorder %s97, %s98
      %p109 = scmp.eq.s32.totalorder %s21, 0
      %p110 = por %p108, %p109
      %p111 = scmp.ne.s32.totalorder %s97, %s98
      %p112 = scmp.eq.s32.totalorder %s22, 1
      %p113 = por %p111, %p112
      %p115 = scmp.ne.s32.totalorder %s98, %s114
      %p116 = scmp.eq.s32.totalorder %s22, 0
      %p117 = por %p115, %p116
      %p118 = scmp.le.s32.totalorder 1, %s16
      %p119 = scmp.lt.s32.totalorder %s16, 3
      %p120 = pnand %p118, %p119
      %p121 = pneg %p120
      // Predicated region
      $region9: #{tpu_custom_call.1} parent=5 // pred_check
        _
      $region10: #{tpu_custom_call.1} parent=5 // pred_check_branch
        %123 = sbr.rel (%p120) target = $region12
      $region11: #{tpu_custom_call.1} parent=5 // pred_region
        %s124 = ssub.s32 %s16, 1
        // Predicated region
        $region13: #{tpu_custom_call.1} parent=11 // pred_check
          %p125 = pneg %p63
        $region14: #{tpu_custom_call.1} parent=11 // pred_check_branch
          %127 = sbr.rel (%p125) target = $region16
        $region15: #{tpu_custom_call.1} parent=11 // pred_region
          _
        $region16: #{tpu_custom_call.1} parent=11 // pred_fallthru
          _
        // Predicated region
        $region17: #{tpu_custom_call.1} parent=11 // pred_check
          %p128 = pneg %p84
        $region18: #{tpu_custom_call.1} parent=11 // pred_check_branch
          %130 = sbr.rel (%p128) target = $region20
        $region19: #{tpu_custom_call.1} parent=11 // pred_region
          _
        $region20: #{tpu_custom_call.1} parent=11 // pred_fallthru
          _
      $region12: #{tpu_custom_call.1} parent=5 // pred_fallthru
        _
      %p131 = scmp.lt.s32.totalorder %s16, 2
      // Predicated region
      $region21: #{tpu_custom_call.1} parent=5 // pred_check
        %p132 = pneg %p131
      $region22: #{tpu_custom_call.1} parent=5 // pred_check_branch
        %134 = sbr.rel (%p132) target = $region24
      $region23: #{tpu_custom_call.1} parent=5 // pred_region
        // Predicated region
        $region25: #{tpu_custom_call.1} parent=23 // pred_check
          %p135 = pneg %p36
        $region26: #{tpu_custom_call.1} parent=23 // pred_check_branch
          %137 = sbr.rel (%p135) target = $region28
        $region27: #{tpu_custom_call.1} parent=23 // pred_region
          %s138 = sand.u32 %s26, 1
          %s139 = scalar_lea.sflag [#allocation4], %s138
          %s140 = sand.u32 %s26, 1
          %s141 = smul.addr %s140, 128
          %s142 = scalar_lea.vmem [#allocation3], %s141
          %s143 = smul.u32 8, %s16
          %s145 = ssub.s32 2048, 2048
          %146 = vsyncadd %s139, %s145
          %s147 = smul.addr %s143, 2
          %s148 = smul.addr %s147, 128
          %s149 = scalar_lea.hbm %s0, %s148
          %s150 = sshll.u32 %s142, 4
          %s151 = int_to_ptr.vmem [resolvable:$true] %s150
          %156 = dma.hbm_to_vmem [thread:$0]  %s149, 2048, %s151, %s139, 128, 128, 8
        $region28: #{tpu_custom_call.1} parent=23 // pred_fallthru
          _
      $region24: #{tpu_custom_call.1} parent=5 // pred_fallthru
        _
      %p157 = scmp.le.s32.totalorder 1, %s16
      %p158 = scmp.lt.s32.totalorder %s16, 3
      %p159 = pnand %p157, %p158
      %p160 = pneg %p159
      // Predicated region
      $region29: #{tpu_custom_call.1} parent=5 // pred_check
        _
      $region30: #{tpu_custom_call.1} parent=5 // pred_check_branch
        %162 = sbr.rel (%p159) target = $region32
      $region31: #{tpu_custom_call.1} parent=5 // pred_region
        %s163 = ssub.s32 %s16, 1
        %s164 = sand.u32 %s29, 1
        %s165 = scalar_lea.sflag [#allocation4], %s164
        %s166 = sand.u32 %s29, 1
        %s167 = smul.addr %s166, 128
        %s168 = scalar_lea.vmem [#allocation3], %s167
        // Predicated region
        $region33: #{tpu_custom_call.1} parent=31 // pred_check
          %p169 = pneg %p42
        $region34: #{tpu_custom_call.1} parent=31 // pred_check_branch
          %171 = sbr.rel (%p169) target = $region36
        $region35: #{tpu_custom_call.1} parent=31 // pred_region
          %172 = dma.done %s165, 2048
        $region36: #{tpu_custom_call.1} parent=31 // pred_fallthru
          _
        %s173 = sand.u32 %s29, 1
        %s174 = scalar_lea.sflag [#allocation4], %s173
        %s175 = sand.u32 %s29, 1
        %s176 = smul.addr %s175, 128
        %s177 = scalar_lea.vmem [#allocation3], %s176
        %p178 = pneg %p42
        %p179 = pneg %p39
        %p180 = pneg %p63
        %p181 = pneg %p60
        %p182 = pneg %p84
        %p183 = pneg %p81
        %p184 = pneg %p110
        %p185 = pneg %p107
        %s186 = sand.u32 %s97, 1
        %s187 = scalar_lea.sflag [#allocation5], %s186
        %s188 = sand.u32 %s97, 1
        %s189 = smul.addr %s188, 8
        %s190 = scalar_lea.vmem [#allocation6], %s189
        %s191 = smul.u32 8, %s21
        %v192 = vld [vmem:[%s1] sm:$0x1]
        %s193 = sld [smem:[#allocation2]]
        %v194 = vld [vmem:[%s168] sm:$0xff]
        %v195 = vld [vmem:[%s168 + $0x8] sm:$0xff]
        %v196 = vld [vmem:[%s168 + $0x10] sm:$0xff]
        %v197 = vld [vmem:[%s168 + $0x18] sm:$0xff]
        %v198 = vld [vmem:[%s168 + $0x20] sm:$0xff]
        %v199 = vld [vmem:[%s168 + $0x28] sm:$0xff]
        %v200 = vld [vmem:[%s168 + $0x30] sm:$0xff]
        %v201 = vld [vmem:[%s168 + $0x38] sm:$0xff]
        %v202 = vld [vmem:[%s168 + $0x40] sm:$0xff]
        %v203 = vld [vmem:[%s168 + $0x48] sm:$0xff]
        %v204 = vld [vmem:[%s168 + $0x50] sm:$0xff]
        %v205 = vld [vmem:[%s168 + $0x58] sm:$0xff]
        %v206 = vld [vmem:[%s168 + $0x60] sm:$0xff]
        %v207 = vld [vmem:[%s168 + $0x68] sm:$0xff]
        %v208 = vld [vmem:[%s168 + $0x70] sm:$0xff]
        %v209 = vld [vmem:[%s168 + $0x78] sm:$0xff]
        %v211 = vlaneseq
        %v212 = vshrl.u32 %v211, 7
        %v213 = vsub.s32 0, %v212
        %v214 = vrot.slane %v192, %v213
        %v216 = vmul.f32 %v194, %v214
        %v217 = vmul.f32 %v195, %v214
        %v218 = vmul.f32 %v196, %v214
        %v219 = vmul.f32 %v197, %v214
        %v220 = vmul.f32 %v198, %v214
        %v221 = vmul.f32 %v199, %v214
        %v222 = vmul.f32 %v200, %v214
        %v223 = vmul.f32 %v201, %v214
        %v224 = vmul.f32 %v202, %v214
        %v225 = vmul.f32 %v203, %v214
        %v226 = vmul.f32 %v204, %v214
        %v227 = vmul.f32 %v205, %v214
        %v228 = vmul.f32 %v206, %v214
        %v229 = vmul.f32 %v207, %v214
        %v230 = vmul.f32 %v208, %v214
        %v231 = vmul.f32 %v209, %v214
        %232 = vadd.xlane.f32.xlu0 %v216
        %v233 = vpop.xlane.xlu0 %232
        %234 = vadd.xlane.f32.xlu0 %v217
        %v235 = vpop.xlane.xlu0 %234
        %236 = vadd.xlane.f32.xlu0 %v218
        %v237 = vpop.xlane.xlu0 %236
        %238 = vadd.xlane.f32.xlu0 %v219
        %v239 = vpop.xlane.xlu0 %238
        %240 = vadd.xlane.f32.xlu0 %v220
        %v241 = vpop.xlane.xlu0 %240
        %242 = vadd.xlane.f32.xlu0 %v221
        %v243 = vpop.xlane.xlu0 %242
        %244 = vadd.xlane.f32.xlu0 %v222
        %v245 = vpop.xlane.xlu0 %244
        %246 = vadd.xlane.f32.xlu0 %v223
        %v247 = vpop.xlane.xlu0 %246
        %248 = vadd.xlane.f32.xlu0 %v224
        %v249 = vpop.xlane.xlu0 %248
        %250 = vadd.xlane.f32.xlu0 %v225
        %v251 = vpop.xlane.xlu0 %250
        %252 = vadd.xlane.f32.xlu0 %v226
        %v253 = vpop.xlane.xlu0 %252
        %254 = vadd.xlane.f32.xlu0 %v227
        %v255 = vpop.xlane.xlu0 %254
        %256 = vadd.xlane.f32.xlu0 %v228
        %v257 = vpop.xlane.xlu0 %256
        %258 = vadd.xlane.f32.xlu0 %v229
        %v259 = vpop.xlane.xlu0 %258
        %260 = vadd.xlane.f32.xlu0 %v230
        %v261 = vpop.xlane.xlu0 %260
        %262 = vadd.xlane.f32.xlu0 %v231
        %v263 = vpop.xlane.xlu0 %262
        %v264 = vstv %s193
        %v265 = vadd.f32 %v233, %v264
        %v266 = vadd.f32 %v235, %v264
        %v267 = vadd.f32 %v237, %v264
        %v268 = vadd.f32 %v239, %v264
        %v269 = vadd.f32 %v241, %v264
        %v270 = vadd.f32 %v243, %v264
        %v271 = vadd.f32 %v245, %v264
        %v272 = vadd.f32 %v247, %v264
        %v273 = vadd.f32 %v249, %v264
        %v274 = vadd.f32 %v251, %v264
        %v275 = vadd.f32 %v253, %v264
        %v276 = vadd.f32 %v255, %v264
        %v277 = vadd.f32 %v257, %v264
        %v278 = vadd.f32 %v259, %v264
        %v279 = vadd.f32 %v261, %v264
        %v280 = vadd.f32 %v263, %v264
        %v297 = vlaneseq
        %v298 = vand.u32 %v297, 127
        %v299 = vlaneseq
        %v300 = vshrl.u32 %v299, 7
        %v301 = vsub.s32 %v298, %v300
        %v302 = vrot.slane %v265, %v301
        %v303 = vadd.s32 %v298, 4294967288
        %v304 = vlaneseq
        %v305 = vshrl.u32 %v304, 7
        %v306 = vsub.s32 %v303, %v305
        %v307 = vrot.slane %v266, %v306
        %vm308 = vcmask 130112
        %v309 = vsel %vm308, %v307, %v302
        %v310 = vlaneseq
        %v311 = vshrl.u32 %v310, 7
        %v312 = vsub.s32 %v298, %v311
        %v313 = vrot.slane %v267, %v312
        %v314 = vlaneseq
        %v315 = vshrl.u32 %v314, 7
        %v316 = vsub.s32 %v303, %v315
        %v317 = vrot.slane %v268, %v316
        %v318 = vsel %vm308, %v317, %v313
        %v319 = vlaneseq
        %v320 = vshrl.u32 %v319, 7
        %v321 = vsub.s32 %v298, %v320
        %v322 = vrot.slane %v269, %v321
        %v323 = vlaneseq
        %v324 = vshrl.u32 %v323, 7
        %v325 = vsub.s32 %v303, %v324
        %v326 = vrot.slane %v270, %v325
        %v327 = vsel %vm308, %v326, %v322
        %v328 = vlaneseq
        %v329 = vshrl.u32 %v328, 7
        %v330 = vsub.s32 %v298, %v329
        %v331 = vrot.slane %v271, %v330
        %v332 = vlaneseq
        %v333 = vshrl.u32 %v332, 7
        %v334 = vsub.s32 %v303, %v333
        %v335 = vrot.slane %v272, %v334
        %v336 = vsel %vm308, %v335, %v331
        %v337 = vlaneseq
        %v338 = vshrl.u32 %v337, 7
        %v339 = vsub.s32 %v298, %v338
        %v340 = vrot.slane %v273, %v339
        %v341 = vlaneseq
        %v342 = vshrl.u32 %v341, 7
        %v343 = vsub.s32 %v303, %v342
        %v344 = vrot.slane %v274, %v343
        %v345 = vsel %vm308, %v344, %v340
        %v346 = vlaneseq
        %v347 = vshrl.u32 %v346, 7
        %v348 = vsub.s32 %v298, %v347
        %v349 = vrot.slane %v275, %v348
        %v350 = vlaneseq
        %v351 = vshrl.u32 %v350, 7
        %v352 = vsub.s32 %v303, %v351
        %v353 = vrot.slane %v276, %v352
        %v354 = vsel %vm308, %v353, %v349
        %v355 = vlaneseq
        %v356 = vshrl.u32 %v355, 7
        %v357 = vsub.s32 %v298, %v356
        %v358 = vrot.slane %v277, %v357
        %v359 = vlaneseq
        %v360 = vshrl.u32 %v359, 7
        %v361 = vsub.s32 %v303, %v360
        %v362 = vrot.slane %v278, %v361
        %v363 = vsel %vm308, %v362, %v358
        %v364 = vlaneseq
        %v365 = vshrl.u32 %v364, 7
        %v366 = vsub.s32 %v298, %v365
        %v367 = vrot.slane %v279, %v366
        %v368 = vlaneseq
        %v369 = vshrl.u32 %v368, 7
        %v370 = vsub.s32 %v303, %v369
        %v371 = vrot.slane %v280, %v370
        %v372 = vsel %vm308, %v371, %v367
        %vm373 = vcmask 1041409
        %v374 = vsel %vm373, %v318, %v309
        %vm375 = vcmask 1042434
        %v376 = vsel %vm375, %v327, %v374
        %vm377 = vcmask 1043459
        %v378 = vsel %vm377, %v336, %v376
        %vm379 = vcmask 1044484
        %v380 = vsel %vm379, %v345, %v378
        %vm381 = vcmask 1045509
        %v382 = vsel %vm381, %v354, %v380
        %vm383 = vcmask 1046534
        %v384 = vsel %vm383, %v363, %v382
        %vm385 = vcmask 1047559
        %v386 = vsel %vm385, %v372, %v384
        %vm388 = vcmask 130048
        %v389 = vsel %vm388, %v386, -inf
        %390 = vmax.xlane.f32.xlu0 %v389
        %v391 = vpop.xlane.xlu0 %390
        %v393 = vlaneseq
        %v394 = vshrl.u32 %v393, 7
        %v395 = vsub.s32 0, %v394
        %v396 = vrot.slane %v391, %v395
        %v397 = vlaneseq
        %v398 = vshrl.u32 %v397, 7
        %v399 = vsub.s32 1, %v398
        %v400 = vrot.slane %v391, %v399
        %v401 = vlaneseq
        %v402 = vshrl.u32 %v401, 7
        %v403 = vsub.s32 2, %v402
        %v404 = vrot.slane %v391, %v403
        %v405 = vlaneseq
        %v406 = vshrl.u32 %v405, 7
        %v407 = vsub.s32 3, %v406
        %v408 = vrot.slane %v391, %v407
        %v409 = vlaneseq
        %v410 = vshrl.u32 %v409, 7
        %v411 = vsub.s32 4, %v410
        %v412 = vrot.slane %v391, %v411
        %v413 = vlaneseq
        %v414 = vshrl.u32 %v413, 7
        %v415 = vsub.s32 5, %v414
        %v416 = vrot.slane %v391, %v415
        %v417 = vlaneseq
        %v418 = vshrl.u32 %v417, 7
        %v419 = vsub.s32 6, %v418
        %v420 = vrot.slane %v391, %v419
        %v421 = vlaneseq
        %v422 = vshrl.u32 %v421, 7
        %v423 = vsub.s32 7, %v422
        %v424 = vrot.slane %v391, %v423
        %v433 = vsub.f32 %v265, %v396
        %v434 = vsub.f32 %v266, %v396
        %v435 = vsub.f32 %v267, %v400
        %v436 = vsub.f32 %v268, %v400
        %v437 = vsub.f32 %v269, %v404
        %v438 = vsub.f32 %v270, %v404
        %v439 = vsub.f32 %v271, %v408
        %v440 = vsub.f32 %v272, %v408
        %v441 = vsub.f32 %v273, %v412
        %v442 = vsub.f32 %v274, %v412
        %v443 = vsub.f32 %v275, %v416
        %v444 = vsub.f32 %v276, %v416
        %v445 = vsub.f32 %v277, %v420
        %v446 = vsub.f32 %v278, %v420
        %v447 = vsub.f32 %v279, %v424
        %v448 = vsub.f32 %v280, %v424
        %v449 = vmul.f32 %v433, 1.442695
        %v450 = vpow.pop %v449
        %v451 = vmul.f32 %v434, 1.442695
        %v452 = vpow.pop %v451
        %v453 = vmul.f32 %v435, 1.442695
        %v454 = vpow.pop %v453
        %v455 = vmul.f32 %v436, 1.442695
        %v456 = vpow.pop %v455
        %v457 = vmul.f32 %v437, 1.442695
        %v458 = vpow.pop %v457
        %v459 = vmul.f32 %v438, 1.442695
        %v460 = vpow.pop %v459
        %v461 = vmul.f32 %v439, 1.442695
        %v462 = vpow.pop %v461
        %v463 = vmul.f32 %v440, 1.442695
        %v464 = vpow.pop %v463
        %v465 = vmul.f32 %v441, 1.442695
        %v466 = vpow.pop %v465
        %v467 = vmul.f32 %v442, 1.442695
        %v468 = vpow.pop %v467
        %v469 = vmul.f32 %v443, 1.442695
        %v470 = vpow.pop %v469
        %v471 = vmul.f32 %v444, 1.442695
        %v472 = vpow.pop %v471
        %v473 = vmul.f32 %v445, 1.442695
        %v474 = vpow.pop %v473
        %v475 = vmul.f32 %v446, 1.442695
        %v476 = vpow.pop %v475
        %v477 = vmul.f32 %v447, 1.442695
        %v478 = vpow.pop %v477
        %v479 = vmul.f32 %v448, 1.442695
        %v480 = vpow.pop %v479
        %497 = vset.pattern.permute.xlu0 0
        %498 = vperm.xlu0 %497, %v450
        %v499 = vpop.permute.xlu0 %498
        %500 = vset.pattern.permute.xlu0 0
        %501 = vperm.xlu0 %500, %v452
        %v502 = vpop.permute.xlu0 %501
        %503 = vset.pattern.permute.xlu0 0
        %504 = vperm.xlu0 %503, %v454
        %v505 = vpop.permute.xlu0 %504
        %506 = vset.pattern.permute.xlu0 0
        %507 = vperm.xlu0 %506, %v456
        %v508 = vpop.permute.xlu0 %507
        %509 = vset.pattern.permute.xlu0 0
        %510 = vperm.xlu0 %509, %v458
        %v511 = vpop.permute.xlu0 %510
        %512 = vset.pattern.permute.xlu0 0
        %513 = vperm.xlu0 %512, %v460
        %v514 = vpop.permute.xlu0 %513
        %515 = vset.pattern.permute.xlu0 0
        %516 = vperm.xlu0 %515, %v462
        %v517 = vpop.permute.xlu0 %516
        %518 = vset.pattern.permute.xlu0 0
        %519 = vperm.xlu0 %518, %v464
        %v520 = vpop.permute.xlu0 %519
        %521 = vset.pattern.permute.xlu0 0
        %522 = vperm.xlu0 %521, %v466
        %v523 = vpop.permute.xlu0 %522
        %524 = vset.pattern.permute.xlu0 0
        %525 = vperm.xlu0 %524, %v468
        %v526 = vpop.permute.xlu0 %525
        %527 = vset.pattern.permute.xlu0 0
        %528 = vperm.xlu0 %527, %v470
        %v529 = vpop.permute.xlu0 %528
        %530 = vset.pattern.permute.xlu0 0
        %531 = vperm.xlu0 %530, %v472
        %v532 = vpop.permute.xlu0 %531
        %533 = vset.pattern.permute.xlu0 0
        %534 = vperm.xlu0 %533, %v474
        %v535 = vpop.permute.xlu0 %534
        %536 = vset.pattern.permute.xlu0 0
        %537 = vperm.xlu0 %536, %v476
        %v538 = vpop.permute.xlu0 %537
        %539 = vset.pattern.permute.xlu0 0
        %540 = vperm.xlu0 %539, %v478
        %v541 = vpop.permute.xlu0 %540
        %542 = vset.pattern.permute.xlu0 0
        %543 = vperm.xlu0 %542, %v480
        %v544 = vpop.permute.xlu0 %543
        %v545 = vlaneseq
        %v546 = vshrl.u32 %v545, 7
        %v547 = vsub.s32 %v298, %v546
        %v548 = vrot.slane %v499, %v547
        %v549 = vlaneseq
        %v550 = vshrl.u32 %v549, 7
        %v551 = vsub.s32 %v303, %v550
        %v552 = vrot.slane %v502, %v551
        %v553 = vsel %vm308, %v552, %v548
        %v554 = vlaneseq
        %v555 = vshrl.u32 %v554, 7
        %v556 = vsub.s32 %v298, %v555
        %v557 = vrot.slane %v505, %v556
        %v558 = vlaneseq
        %v559 = vshrl.u32 %v558, 7
        %v560 = vsub.s32 %v303, %v559
        %v561 = vrot.slane %v508, %v560
        %v562 = vsel %vm308, %v561, %v557
        %v563 = vlaneseq
        %v564 = vshrl.u32 %v563, 7
        %v565 = vsub.s32 %v298, %v564
        %v566 = vrot.slane %v511, %v565
        %v567 = vlaneseq
        %v568 = vshrl.u32 %v567, 7
        %v569 = vsub.s32 %v303, %v568
        %v570 = vrot.slane %v514, %v569
        %v571 = vsel %vm308, %v570, %v566
        %v572 = vlaneseq
        %v573 = vshrl.u32 %v572, 7
        %v574 = vsub.s32 %v298, %v573
        %v575 = vrot.slane %v517, %v574
        %v576 = vlaneseq
        %v577 = vshrl.u32 %v576, 7
        %v578 = vsub.s32 %v303, %v577
        %v579 = vrot.slane %v520, %v578
        %v580 = vsel %vm308, %v579, %v575
        %v581 = vlaneseq
        %v582 = vshrl.u32 %v581, 7
        %v583 = vsub.s32 %v298, %v582
        %v584 = vrot.slane %v523, %v583
        %v585 = vlaneseq
        %v586 = vshrl.u32 %v585, 7
        %v587 = vsub.s32 %v303, %v586
        %v588 = vrot.slane %v526, %v587
        %v589 = vsel %vm308, %v588, %v584
        %v590 = vlaneseq
        %v591 = vshrl.u32 %v590, 7
        %v592 = vsub.s32 %v298, %v591
        %v593 = vrot.slane %v529, %v592
        %v594 = vlaneseq
        %v595 = vshrl.u32 %v594, 7
        %v596 = vsub.s32 %v303, %v595
        %v597 = vrot.slane %v532, %v596
        %v598 = vsel %vm308, %v597, %v593
        %v599 = vlaneseq
        %v600 = vshrl.u32 %v599, 7
        %v601 = vsub.s32 %v298, %v600
        %v602 = vrot.slane %v535, %v601
        %v603 = vlaneseq
        %v604 = vshrl.u32 %v603, 7
        %v605 = vsub.s32 %v303, %v604
        %v606 = vrot.slane %v538, %v605
        %v607 = vsel %vm308, %v606, %v602
        %v608 = vlaneseq
        %v609 = vshrl.u32 %v608, 7
        %v610 = vsub.s32 %v298, %v609
        %v611 = vrot.slane %v541, %v610
        %v612 = vlaneseq
        %v613 = vshrl.u32 %v612, 7
        %v614 = vsub.s32 %v303, %v613
        %v615 = vrot.slane %v544, %v614
        %v616 = vsel %vm308, %v615, %v611
        %v617 = vsel %vm373, %v562, %v553
        %v618 = vsel %vm375, %v571, %v617
        %v619 = vsel %vm377, %v580, %v618
        %v620 = vsel %vm379, %v589, %v619
        %v621 = vsel %vm381, %v598, %v620
        %v622 = vsel %vm383, %v607, %v621
        %v623 = vsel %vm385, %v616, %v622
        %v625 = vsel %vm388, %v623, 0.0
        %626 = vadd.xlane.f32.xlu0 %v625
        %v627 = vpop.xlane.xlu0 %626
        %v629 = vlaneseq
        %v630 = vshrl.u32 %v629, 7
        %v631 = vsub.s32 0, %v630
        %v632 = vrot.slane %v627, %v631
        %v633 = vlaneseq
        %v634 = vshrl.u32 %v633, 7
        %v635 = vsub.s32 1, %v634
        %v636 = vrot.slane %v627, %v635
        %v637 = vlaneseq
        %v638 = vshrl.u32 %v637, 7
        %v639 = vsub.s32 2, %v638
        %v640 = vrot.slane %v627, %v639
        %v641 = vlaneseq
        %v642 = vshrl.u32 %v641, 7
        %v643 = vsub.s32 3, %v642
        %v644 = vrot.slane %v627, %v643
        %v645 = vlaneseq
        %v646 = vshrl.u32 %v645, 7
        %v647 = vsub.s32 4, %v646
        %v648 = vrot.slane %v627, %v647
        %v649 = vlaneseq
        %v650 = vshrl.u32 %v649, 7
        %v651 = vsub.s32 5, %v650
        %v652 = vrot.slane %v627, %v651
        %v653 = vlaneseq
        %v654 = vshrl.u32 %v653, 7
        %v655 = vsub.s32 6, %v654
        %v656 = vrot.slane %v627, %v655
        %v657 = vlaneseq
        %v658 = vshrl.u32 %v657, 7
        %v659 = vsub.s32 7, %v658
        %v660 = vrot.slane %v627, %v659
        %v669 = vrcp.pop %v632
        %v670 = vmul.f32 %v450, %v669
        %v671 = vmul.f32 %v452, %v669
        %v672 = vrcp.pop %v636
        %v673 = vmul.f32 %v454, %v672
        %v674 = vmul.f32 %v456, %v672
        %v675 = vrcp.pop %v640
        %v676 = vmul.f32 %v458, %v675
        %v677 = vmul.f32 %v460, %v675
        %v678 = vrcp.pop %v644
        %v679 = vmul.f32 %v462, %v678
        %v680 = vmul.f32 %v464, %v678
        %v681 = vrcp.pop %v648
        %v682 = vmul.f32 %v466, %v681
        %v683 = vmul.f32 %v468, %v681
        %v684 = vrcp.pop %v652
        %v685 = vmul.f32 %v470, %v684
        %v686 = vmul.f32 %v472, %v684
        %v687 = vrcp.pop %v656
        %v688 = vmul.f32 %v474, %v687
        %v689 = vmul.f32 %v476, %v687
        %v690 = vrcp.pop %v660
        %v691 = vmul.f32 %v478, %v690
        %v692 = vmul.f32 %v480, %v690
        %v693 = vld [vmem:[%s168] sm:$0x1]
        %v694 = vld [vmem:[%s168 + $0x10] sm:$0x1]
        %v695 = vld [vmem:[%s168 + $0x20] sm:$0x1]
        %v696 = vld [vmem:[%s168 + $0x30] sm:$0x1]
        %v697 = vld [vmem:[%s168 + $0x40] sm:$0x1]
        %v698 = vld [vmem:[%s168 + $0x50] sm:$0x1]
        %v699 = vld [vmem:[%s168 + $0x60] sm:$0x1]
        %v700 = vld [vmem:[%s168 + $0x70] sm:$0x1]
        %v701 = vlaneseq
        %v702 = vshrl.u32 %v701, 7
        %v703 = vsub.s32 0, %v702
        %v704 = vrot.slane %v670, %v703
        %v705 = vlaneseq
        %v706 = vshrl.u32 %v705, 7
        %v707 = vsub.s32 0, %v706
        %v708 = vrot.slane %v673, %v707
        %v709 = vlaneseq
        %v710 = vshrl.u32 %v709, 7
        %v711 = vsub.s32 0, %v710
        %v712 = vrot.slane %v676, %v711
        %v713 = vlaneseq
        %v714 = vshrl.u32 %v713, 7
        %v715 = vsub.s32 0, %v714
        %v716 = vrot.slane %v679, %v715
        %v717 = vlaneseq
        %v718 = vshrl.u32 %v717, 7
        %v719 = vsub.s32 0, %v718
        %v720 = vrot.slane %v682, %v719
        %v721 = vlaneseq
        %v722 = vshrl.u32 %v721, 7
        %v723 = vsub.s32 0, %v722
        %v724 = vrot.slane %v685, %v723
        %v725 = vlaneseq
        %v726 = vshrl.u32 %v725, 7
        %v727 = vsub.s32 0, %v726
        %v728 = vrot.slane %v688, %v727
        %v729 = vlaneseq
        %v730 = vshrl.u32 %v729, 7
        %v731 = vsub.s32 0, %v730
        %v732 = vrot.slane %v691, %v731
        %741 = vset.pattern.permute.xlu0 0
        %742 = vperm.xlu0 %741, %v704
        %v743 = vpop.permute.xlu0 %742
        %744 = vset.pattern.permute.xlu0 0
        %745 = vperm.xlu0 %744, %v708
        %v746 = vpop.permute.xlu0 %745
        %747 = vset.pattern.permute.xlu0 0
        %748 = vperm.xlu0 %747, %v712
        %v749 = vpop.permute.xlu0 %748
        %750 = vset.pattern.permute.xlu0 0
        %751 = vperm.xlu0 %750, %v716
        %v752 = vpop.permute.xlu0 %751
        %753 = vset.pattern.permute.xlu0 0
        %754 = vperm.xlu0 %753, %v720
        %v755 = vpop.permute.xlu0 %754
        %756 = vset.pattern.permute.xlu0 0
        %757 = vperm.xlu0 %756, %v724
        %v758 = vpop.permute.xlu0 %757
        %759 = vset.pattern.permute.xlu0 0
        %760 = vperm.xlu0 %759, %v728
        %v761 = vpop.permute.xlu0 %760
        %762 = vset.pattern.permute.xlu0 0
        %763 = vperm.xlu0 %762, %v732
        %v764 = vpop.permute.xlu0 %763
        %v773 = vmul.f32 %v693, %v743
        %v774 = vmul.f32 %v694, %v746
        %v775 = vmul.f32 %v695, %v749
        %v776 = vmul.f32 %v696, %v752
        %v777 = vmul.f32 %v697, %v755
        %v778 = vmul.f32 %v698, %v758
        %v779 = vmul.f32 %v699, %v761
        %v780 = vmul.f32 %v700, %v764
        %v781 = vld [vmem:[%s168 + $0x1] sm:$0x1]
        %v782 = vld [vmem:[%s168 + $0x11] sm:$0x1]
        %v783 = vld [vmem:[%s168 + $0x21] sm:$0x1]
        %v784 = vld [vmem:[%s168 + $0x31] sm:$0x1]
        %v785 = vld [vmem:[%s168 + $0x41] sm:$0x1]
        %v786 = vld [vmem:[%s168 + $0x51] sm:$0x1]
        %v787 = vld [vmem:[%s168 + $0x61] sm:$0x1]
        %v788 = vld [vmem:[%s168 + $0x71] sm:$0x1]
        %v789 = vlaneseq
        %v790 = vshrl.u32 %v789, 7
        %v791 = vsub.s32 1, %v790
        %v792 = vrot.slane %v670, %v791
        %v793 = vlaneseq
        %v794 = vshrl.u32 %v793, 7
        %v795 = vsub.s32 1, %v794
        %v796 = vrot.slane %v673, %v795
        %v797 = vlaneseq
        %v798 = vshrl.u32 %v797, 7
        %v799 = vsub.s32 1, %v798
        %v800 = vrot.slane %v676, %v799
        %v801 = vlaneseq
        %v802 = vshrl.u32 %v801, 7
        %v803 = vsub.s32 1, %v802
        %v804 = vrot.slane %v679, %v803
        %v805 = vlaneseq
        %v806 = vshrl.u32 %v805, 7
        %v807 = vsub.s32 1, %v806
        %v808 = vrot.slane %v682, %v807
        %v809 = vlaneseq
        %v810 = vshrl.u32 %v809, 7
        %v811 = vsub.s32 1, %v810
        %v812 = vrot.slane %v685, %v811
        %v813 = vlaneseq
        %v814 = vshrl.u32 %v813, 7
        %v815 = vsub.s32 1, %v814
        %v816 = vrot.slane %v688, %v815
        %v817 = vlaneseq
        %v818 = vshrl.u32 %v817, 7
        %v819 = vsub.s32 1, %v818
        %v820 = vrot.slane %v691, %v819
        %829 = vset.pattern.permute.xlu0 0
        %830 = vperm.xlu0 %829, %v792
        %v831 = vpop.permute.xlu0 %830
        %832 = vset.pattern.permute.xlu0 0
        %833 = vperm.xlu0 %832, %v796
        %v834 = vpop.permute.xlu0 %833
        %835 = vset.pattern.permute.xlu0 0
        %836 = vperm.xlu0 %835, %v800
        %v837 = vpop.permute.xlu0 %836
        %838 = vset.pattern.permute.xlu0 0
        %839 = vperm.xlu0 %838, %v804
        %v840 = vpop.permute.xlu0 %839
        %841 = vset.pattern.permute.xlu0 0
        %842 = vperm.xlu0 %841, %v808
        %v843 = vpop.permute.xlu0 %842
        %844 = vset.pattern.permute.xlu0 0
        %845 = vperm.xlu0 %844, %v812
        %v846 = vpop.permute.xlu0 %845
        %847 = vset.pattern.permute.xlu0 0
        %848 = vperm.xlu0 %847, %v816
        %v849 = vpop.permute.xlu0 %848
        %850 = vset.pattern.permute.xlu0 0
        %851 = vperm.xlu0 %850, %v820
        %v852 = vpop.permute.xlu0 %851
        %v861 = vmul.f32 %v781, %v831
        %v862 = vmul.f32 %v782, %v834
        %v863 = vmul.f32 %v783, %v837
        %v864 = vmul.f32 %v784, %v840
        %v865 = vmul.f32 %v785, %v843
        %v866 = vmul.f32 %v786, %v846
        %v867 = vmul.f32 %v787, %v849
        %v868 = vmul.f32 %v788, %v852
        %v869 = vadd.f32 %v773, %v861
        %v870 = vadd.f32 %v774, %v862
        %v871 = vadd.f32 %v775, %v863
        %v872 = vadd.f32 %v776, %v864
        %v873 = vadd.f32 %v777, %v865
        %v874 = vadd.f32 %v778, %v866
        %v875 = vadd.f32 %v779, %v867
        %v876 = vadd.f32 %v780, %v868
        %v877 = vld [vmem:[%s168 + $0x2] sm:$0x1]
        %v878 = vld [vmem:[%s168 + $0x12] sm:$0x1]
        %v879 = vld [vmem:[%s168 + $0x22] sm:$0x1]
        %v880 = vld [vmem:[%s168 + $0x32] sm:$0x1]
        %v881 = vld [vmem:[%s168 + $0x42] sm:$0x1]
        %v882 = vld [vmem:[%s168 + $0x52] sm:$0x1]
        %v883 = vld [vmem:[%s168 + $0x62] sm:$0x1]
        %v884 = vld [vmem:[%s168 + $0x72] sm:$0x1]
        %v885 = vlaneseq
        %v886 = vshrl.u32 %v885, 7
        %v887 = vsub.s32 2, %v886
        %v888 = vrot.slane %v670, %v887
        %v889 = vlaneseq
        %v890 = vshrl.u32 %v889, 7
        %v891 = vsub.s32 2, %v890
        %v892 = vrot.slane %v673, %v891
        %v893 = vlaneseq
        %v894 = vshrl.u32 %v893, 7
        %v895 = vsub.s32 2, %v894
        %v896 = vrot.slane %v676, %v895
        %v897 = vlaneseq
        %v898 = vshrl.u32 %v897, 7
        %v899 = vsub.s32 2, %v898
        %v900 = vrot.slane %v679, %v899
        %v901 = vlaneseq
        %v902 = vshrl.u32 %v901, 7
        %v903 = vsub.s32 2, %v902
        %v904 = vrot.slane %v682, %v903
        %v905 = vlaneseq
        %v906 = vshrl.u32 %v905, 7
        %v907 = vsub.s32 2, %v906
        %v908 = vrot.slane %v685, %v907
        %v909 = vlaneseq
        %v910 = vshrl.u32 %v909, 7
        %v911 = vsub.s32 2, %v910
        %v912 = vrot.slane %v688, %v911
        %v913 = vlaneseq
        %v914 = vshrl.u32 %v913, 7
        %v915 = vsub.s32 2, %v914
        %v916 = vrot.slane %v691, %v915
        %925 = vset.pattern.permute.xlu0 0
        %926 = vperm.xlu0 %925, %v888
        %v927 = vpop.permute.xlu0 %926
        %928 = vset.pattern.permute.xlu0 0
        %929 = vperm.xlu0 %928, %v892
        %v930 = vpop.permute.xlu0 %929
        %931 = vset.pattern.permute.xlu0 0
        %932 = vperm.xlu0 %931, %v896
        %v933 = vpop.permute.xlu0 %932
        %934 = vset.pattern.permute.xlu0 0
        %935 = vperm.xlu0 %934, %v900
        %v936 = vpop.permute.xlu0 %935
        %937 = vset.pattern.permute.xlu0 0
        %938 = vperm.xlu0 %937, %v904
        %v939 = vpop.permute.xlu0 %938
        %940 = vset.pattern.permute.xlu0 0
        %941 = vperm.xlu0 %940, %v908
        %v942 = vpop.permute.xlu0 %941
        %943 = vset.pattern.permute.xlu0 0
        %944 = vperm.xlu0 %943, %v912
        %v945 = vpop.permute.xlu0 %944
        %946 = vset.pattern.permute.xlu0 0
        %947 = vperm.xlu0 %946, %v916
        %v948 = vpop.permute.xlu0 %947
        %v957 = vmul.f32 %v877, %v927
        %v958 = vmul.f32 %v878, %v930
        %v959 = vmul.f32 %v879, %v933
        %v960 = vmul.f32 %v880, %v936
        %v961 = vmul.f32 %v881, %v939
        %v962 = vmul.f32 %v882, %v942
        %v963 = vmul.f32 %v883, %v945
        %v964 = vmul.f32 %v884, %v948
        %v965 = vadd.f32 %v869, %v957
        %v966 = vadd.f32 %v870, %v958
        %v967 = vadd.f32 %v871, %v959
        %v968 = vadd.f32 %v872, %v960
        %v969 = vadd.f32 %v873, %v961
        %v970 = vadd.f32 %v874, %v962
        %v971 = vadd.f32 %v875, %v963
        %v972 = vadd.f32 %v876, %v964
        %v973 = vld [vmem:[%s168 + $0x3] sm:$0x1]
        %v974 = vld [vmem:[%s168 + $0x13] sm:$0x1]
        %v975 = vld [vmem:[%s168 + $0x23] sm:$0x1]
        %v976 = vld [vmem:[%s168 + $0x33] sm:$0x1]
        %v977 = vld [vmem:[%s168 + $0x43] sm:$0x1]
        %v978 = vld [vmem:[%s168 + $0x53] sm:$0x1]
        %v979 = vld [vmem:[%s168 + $0x63] sm:$0x1]
        %v980 = vld [vmem:[%s168 + $0x73] sm:$0x1]
        %v981 = vlaneseq
        %v982 = vshrl.u32 %v981, 7
        %v983 = vsub.s32 3, %v982
        %v984 = vrot.slane %v670, %v983
        %v985 = vlaneseq
        %v986 = vshrl.u32 %v985, 7
        %v987 = vsub.s32 3, %v986
        %v988 = vrot.slane %v673, %v987
        %v989 = vlaneseq
        %v990 = vshrl.u32 %v989, 7
        %v991 = vsub.s32 3, %v990
        %v992 = vrot.slane %v676, %v991
        %v993 = vlaneseq
        %v994 = vshrl.u32 %v993, 7
        %v995 = vsub.s32 3, %v994
        %v996 = vrot.slane %v679, %v995
        %v997 = vlaneseq
        %v998 = vshrl.u32 %v997, 7
        %v999 = vsub.s32 3, %v998
        %v1000 = vrot.slane %v682, %v999
        %v1001 = vlaneseq
        %v1002 = vshrl.u32 %v1001, 7
        %v1003 = vsub.s32 3, %v1002
        %v1004 = vrot.slane %v685, %v1003
        %v1005 = vlaneseq
        %v1006 = vshrl.u32 %v1005, 7
        %v1007 = vsub.s32 3, %v1006
        %v1008 = vrot.slane %v688, %v1007
        %v1009 = vlaneseq
        %v1010 = vshrl.u32 %v1009, 7
        %v1011 = vsub.s32 3, %v1010
        %v1012 = vrot.slane %v691, %v1011
        %1021 = vset.pattern.permute.xlu0 0
        %1022 = vperm.xlu0 %1021, %v984
        %v1023 = vpop.permute.xlu0 %1022
        %1024 = vset.pattern.permute.xlu0 0
        %1025 = vperm.xlu0 %1024, %v988
        %v1026 = vpop.permute.xlu0 %1025
        %1027 = vset.pattern.permute.xlu0 0
        %1028 = vperm.xlu0 %1027, %v992
        %v1029 = vpop.permute.xlu0 %1028
        %1030 = vset.pattern.permute.xlu0 0
        %1031 = vperm.xlu0 %1030, %v996
        %v1032 = vpop.permute.xlu0 %1031
        %1033 = vset.pattern.permute.xlu0 0
        %1034 = vperm.xlu0 %1033, %v1000
        %v1035 = vpop.permute.xlu0 %1034
        %1036 = vset.pattern.permute.xlu0 0
        %1037 = vperm.xlu0 %1036, %v1004
        %v1038 = vpop.permute.xlu0 %1037
        %1039 = vset.pattern.permute.xlu0 0
        %1040 = vperm.xlu0 %1039, %v1008
        %v1041 = vpop.permute.xlu0 %1040
        %1042 = vset.pattern.permute.xlu0 0
        %1043 = vperm.xlu0 %1042, %v1012
        %v1044 = vpop.permute.xlu0 %1043
        %v1053 = vmul.f32 %v973, %v1023
        %v1054 = vmul.f32 %v974, %v1026
        %v1055 = vmul.f32 %v975, %v1029
        %v1056 = vmul.f32 %v976, %v1032
        %v1057 = vmul.f32 %v977, %v1035
        %v1058 = vmul.f32 %v978, %v1038
        %v1059 = vmul.f32 %v979, %v1041
        %v1060 = vmul.f32 %v980, %v1044
        %v1061 = vadd.f32 %v965, %v1053
        %v1062 = vadd.f32 %v966, %v1054
        %v1063 = vadd.f32 %v967, %v1055
        %v1064 = vadd.f32 %v968, %v1056
        %v1065 = vadd.f32 %v969, %v1057
        %v1066 = vadd.f32 %v970, %v1058
        %v1067 = vadd.f32 %v971, %v1059
        %v1068 = vadd.f32 %v972, %v1060
        %v1069 = vld [vmem:[%s168 + $0x4] sm:$0x1]
        %v1070 = vld [vmem:[%s168 + $0x14] sm:$0x1]
        %v1071 = vld [vmem:[%s168 + $0x24] sm:$0x1]
        %v1072 = vld [vmem:[%s168 + $0x34] sm:$0x1]
        %v1073 = vld [vmem:[%s168 + $0x44] sm:$0x1]
        %v1074 = vld [vmem:[%s168 + $0x54] sm:$0x1]
        %v1075 = vld [vmem:[%s168 + $0x64] sm:$0x1]
        %v1076 = vld [vmem:[%s168 + $0x74] sm:$0x1]
        %v1077 = vlaneseq
        %v1078 = vshrl.u32 %v1077, 7
        %v1079 = vsub.s32 4, %v1078
        %v1080 = vrot.slane %v670, %v1079
        %v1081 = vlaneseq
        %v1082 = vshrl.u32 %v1081, 7
        %v1083 = vsub.s32 4, %v1082
        %v1084 = vrot.slane %v673, %v1083
        %v1085 = vlaneseq
        %v1086 = vshrl.u32 %v1085, 7
        %v1087 = vsub.s32 4, %v1086
        %v1088 = vrot.slane %v676, %v1087
        %v1089 = vlaneseq
        %v1090 = vshrl.u32 %v1089, 7
        %v1091 = vsub.s32 4, %v1090
        %v1092 = vrot.slane %v679, %v1091
        %v1093 = vlaneseq
        %v1094 = vshrl.u32 %v1093, 7
        %v1095 = vsub.s32 4, %v1094
        %v1096 = vrot.slane %v682, %v1095
        %v1097 = vlaneseq
        %v1098 = vshrl.u32 %v1097, 7
        %v1099 = vsub.s32 4, %v1098
        %v1100 = vrot.slane %v685, %v1099
        %v1101 = vlaneseq
        %v1102 = vshrl.u32 %v1101, 7
        %v1103 = vsub.s32 4, %v1102
        %v1104 = vrot.slane %v688, %v1103
        %v1105 = vlaneseq
        %v1106 = vshrl.u32 %v1105, 7
        %v1107 = vsub.s32 4, %v1106
        %v1108 = vrot.slane %v691, %v1107
        %1117 = vset.pattern.permute.xlu0 0
        %1118 = vperm.xlu0 %1117, %v1080
        %v1119 = vpop.permute.xlu0 %1118
        %1120 = vset.pattern.permute.xlu0 0
        %1121 = vperm.xlu0 %1120, %v1084
        %v1122 = vpop.permute.xlu0 %1121
        %1123 = vset.pattern.permute.xlu0 0
        %1124 = vperm.xlu0 %1123, %v1088
        %v1125 = vpop.permute.xlu0 %1124
        %1126 = vset.pattern.permute.xlu0 0
        %1127 = vperm.xlu0 %1126, %v1092
        %v1128 = vpop.permute.xlu0 %1127
        %1129 = vset.pattern.permute.xlu0 0
        %1130 = vperm.xlu0 %1129, %v1096
        %v1131 = vpop.permute.xlu0 %1130
        %1132 = vset.pattern.permute.xlu0 0
        %1133 = vperm.xlu0 %1132, %v1100
        %v1134 = vpop.permute.xlu0 %1133
        %1135 = vset.pattern.permute.xlu0 0
        %1136 = vperm.xlu0 %1135, %v1104
        %v1137 = vpop.permute.xlu0 %1136
        %1138 = vset.pattern.permute.xlu0 0
        %1139 = vperm.xlu0 %1138, %v1108
        %v1140 = vpop.permute.xlu0 %1139
        %v1149 = vmul.f32 %v1069, %v1119
        %v1150 = vmul.f32 %v1070, %v1122
        %v1151 = vmul.f32 %v1071, %v1125
        %v1152 = vmul.f32 %v1072, %v1128
        %v1153 = vmul.f32 %v1073, %v1131
        %v1154 = vmul.f32 %v1074, %v1134
        %v1155 = vmul.f32 %v1075, %v1137
        %v1156 = vmul.f32 %v1076, %v1140
        %v1157 = vadd.f32 %v1061, %v1149
        %v1158 = vadd.f32 %v1062, %v1150
        %v1159 = vadd.f32 %v1063, %v1151
        %v1160 = vadd.f32 %v1064, %v1152
        %v1161 = vadd.f32 %v1065, %v1153
        %v1162 = vadd.f32 %v1066, %v1154
        %v1163 = vadd.f32 %v1067, %v1155
        %v1164 = vadd.f32 %v1068, %v1156
        %v1165 = vld [vmem:[%s168 + $0x5] sm:$0x1]
        %v1166 = vld [vmem:[%s168 + $0x15] sm:$0x1]
        %v1167 = vld [vmem:[%s168 + $0x25] sm:$0x1]
        %v1168 = vld [vmem:[%s168 + $0x35] sm:$0x1]
        %v1169 = vld [vmem:[%s168 + $0x45] sm:$0x1]
        %v1170 = vld [vmem:[%s168 + $0x55] sm:$0x1]
        %v1171 = vld [vmem:[%s168 + $0x65] sm:$0x1]
        %v1172 = vld [vmem:[%s168 + $0x75] sm:$0x1]
        %v1173 = vlaneseq
        %v1174 = vshrl.u32 %v1173, 7
        %v1175 = vsub.s32 5, %v1174
        %v1176 = vrot.slane %v670, %v1175
        %v1177 = vlaneseq
        %v1178 = vshrl.u32 %v1177, 7
        %v1179 = vsub.s32 5, %v1178
        %v1180 = vrot.slane %v673, %v1179
        %v1181 = vlaneseq
        %v1182 = vshrl.u32 %v1181, 7
        %v1183 = vsub.s32 5, %v1182
        %v1184 = vrot.slane %v676, %v1183
        %v1185 = vlaneseq
        %v1186 = vshrl.u32 %v1185, 7
        %v1187 = vsub.s32 5, %v1186
        %v1188 = vrot.slane %v679, %v1187
        %v1189 = vlaneseq
        %v1190 = vshrl.u32 %v1189, 7
        %v1191 = vsub.s32 5, %v1190
        %v1192 = vrot.slane %v682, %v1191
        %v1193 = vlaneseq
        %v1194 = vshrl.u32 %v1193, 7
        %v1195 = vsub.s32 5, %v1194
        %v1196 = vrot.slane %v685, %v1195
        %v1197 = vlaneseq
        %v1198 = vshrl.u32 %v1197, 7
        %v1199 = vsub.s32 5, %v1198
        %v1200 = vrot.slane %v688, %v1199
        %v1201 = vlaneseq
        %v1202 = vshrl.u32 %v1201, 7
        %v1203 = vsub.s32 5, %v1202
        %v1204 = vrot.slane %v691, %v1203
        %1213 = vset.pattern.permute.xlu0 0
        %1214 = vperm.xlu0 %1213, %v1176
        %v1215 = vpop.permute.xlu0 %1214
        %1216 = vset.pattern.permute.xlu0 0
        %1217 = vperm.xlu0 %1216, %v1180
        %v1218 = vpop.permute.xlu0 %1217
        %1219 = vset.pattern.permute.xlu0 0
        %1220 = vperm.xlu0 %1219, %v1184
        %v1221 = vpop.permute.xlu0 %1220
        %1222 = vset.pattern.permute.xlu0 0
        %1223 = vperm.xlu0 %1222, %v1188
        %v1224 = vpop.permute.xlu0 %1223
        %1225 = vset.pattern.permute.xlu0 0
        %1226 = vperm.xlu0 %1225, %v1192
        %v1227 = vpop.permute.xlu0 %1226
        %1228 = vset.pattern.permute.xlu0 0
        %1229 = vperm.xlu0 %1228, %v1196
        %v1230 = vpop.permute.xlu0 %1229
        %1231 = vset.pattern.permute.xlu0 0
        %1232 = vperm.xlu0 %1231, %v1200
        %v1233 = vpop.permute.xlu0 %1232
        %1234 = vset.pattern.permute.xlu0 0
        %1235 = vperm.xlu0 %1234, %v1204
        %v1236 = vpop.permute.xlu0 %1235
        %v1245 = vmul.f32 %v1165, %v1215
        %v1246 = vmul.f32 %v1166, %v1218
        %v1247 = vmul.f32 %v1167, %v1221
        %v1248 = vmul.f32 %v1168, %v1224
        %v1249 = vmul.f32 %v1169, %v1227
        %v1250 = vmul.f32 %v1170, %v1230
        %v1251 = vmul.f32 %v1171, %v1233
        %v1252 = vmul.f32 %v1172, %v1236
        %v1253 = vadd.f32 %v1157, %v1245
        %v1254 = vadd.f32 %v1158, %v1246
        %v1255 = vadd.f32 %v1159, %v1247
        %v1256 = vadd.f32 %v1160, %v1248
        %v1257 = vadd.f32 %v1161, %v1249
        %v1258 = vadd.f32 %v1162, %v1250
        %v1259 = vadd.f32 %v1163, %v1251
        %v1260 = vadd.f32 %v1164, %v1252
        %v1261 = vld [vmem:[%s168 + $0x6] sm:$0x1]
        %v1262 = vld [vmem:[%s168 + $0x16] sm:$0x1]
        %v1263 = vld [vmem:[%s168 + $0x26] sm:$0x1]
        %v1264 = vld [vmem:[%s168 + $0x36] sm:$0x1]
        %v1265 = vld [vmem:[%s168 + $0x46] sm:$0x1]
        %v1266 = vld [vmem:[%s168 + $0x56] sm:$0x1]
        %v1267 = vld [vmem:[%s168 + $0x66] sm:$0x1]
        %v1268 = vld [vmem:[%s168 + $0x76] sm:$0x1]
        %v1269 = vlaneseq
        %v1270 = vshrl.u32 %v1269, 7
        %v1271 = vsub.s32 6, %v1270
        %v1272 = vrot.slane %v670, %v1271
        %v1273 = vlaneseq
        %v1274 = vshrl.u32 %v1273, 7
        %v1275 = vsub.s32 6, %v1274
        %v1276 = vrot.slane %v673, %v1275
        %v1277 = vlaneseq
        %v1278 = vshrl.u32 %v1277, 7
        %v1279 = vsub.s32 6, %v1278
        %v1280 = vrot.slane %v676, %v1279
        %v1281 = vlaneseq
        %v1282 = vshrl.u32 %v1281, 7
        %v1283 = vsub.s32 6, %v1282
        %v1284 = vrot.slane %v679, %v1283
        %v1285 = vlaneseq
        %v1286 = vshrl.u32 %v1285, 7
        %v1287 = vsub.s32 6, %v1286
        %v1288 = vrot.slane %v682, %v1287
        %v1289 = vlaneseq
        %v1290 = vshrl.u32 %v1289, 7
        %v1291 = vsub.s32 6, %v1290
        %v1292 = vrot.slane %v685, %v1291
        %v1293 = vlaneseq
        %v1294 = vshrl.u32 %v1293, 7
        %v1295 = vsub.s32 6, %v1294
        %v1296 = vrot.slane %v688, %v1295
        %v1297 = vlaneseq
        %v1298 = vshrl.u32 %v1297, 7
        %v1299 = vsub.s32 6, %v1298
        %v1300 = vrot.slane %v691, %v1299
        %1309 = vset.pattern.permute.xlu0 0
        %1310 = vperm.xlu0 %1309, %v1272
        %v1311 = vpop.permute.xlu0 %1310
        %1312 = vset.pattern.permute.xlu0 0
        %1313 = vperm.xlu0 %1312, %v1276
        %v1314 = vpop.permute.xlu0 %1313
        %1315 = vset.pattern.permute.xlu0 0
        %1316 = vperm.xlu0 %1315, %v1280
        %v1317 = vpop.permute.xlu0 %1316
        %1318 = vset.pattern.permute.xlu0 0
        %1319 = vperm.xlu0 %1318, %v1284
        %v1320 = vpop.permute.xlu0 %1319
        %1321 = vset.pattern.permute.xlu0 0
        %1322 = vperm.xlu0 %1321, %v1288
        %v1323 = vpop.permute.xlu0 %1322
        %1324 = vset.pattern.permute.xlu0 0
        %1325 = vperm.xlu0 %1324, %v1292
        %v1326 = vpop.permute.xlu0 %1325
        %1327 = vset.pattern.permute.xlu0 0
        %1328 = vperm.xlu0 %1327, %v1296
        %v1329 = vpop.permute.xlu0 %1328
        %1330 = vset.pattern.permute.xlu0 0
        %1331 = vperm.xlu0 %1330, %v1300
        %v1332 = vpop.permute.xlu0 %1331
        %v1341 = vmul.f32 %v1261, %v1311
        %v1342 = vmul.f32 %v1262, %v1314
        %v1343 = vmul.f32 %v1263, %v1317
        %v1344 = vmul.f32 %v1264, %v1320
        %v1345 = vmul.f32 %v1265, %v1323
        %v1346 = vmul.f32 %v1266, %v1326
        %v1347 = vmul.f32 %v1267, %v1329
        %v1348 = vmul.f32 %v1268, %v1332
        %v1349 = vadd.f32 %v1253, %v1341
        %v1350 = vadd.f32 %v1254, %v1342
        %v1351 = vadd.f32 %v1255, %v1343
        %v1352 = vadd.f32 %v1256, %v1344
        %v1353 = vadd.f32 %v1257, %v1345
        %v1354 = vadd.f32 %v1258, %v1346
        %v1355 = vadd.f32 %v1259, %v1347
        %v1356 = vadd.f32 %v1260, %v1348
        %v1357 = vld [vmem:[%s168 + $0x7] sm:$0x1]
        %v1358 = vld [vmem:[%s168 + $0x17] sm:$0x1]
        %v1359 = vld [vmem:[%s168 + $0x27] sm:$0x1]
        %v1360 = vld [vmem:[%s168 + $0x37] sm:$0x1]
        %v1361 = vld [vmem:[%s168 + $0x47] sm:$0x1]
        %v1362 = vld [vmem:[%s168 + $0x57] sm:$0x1]
        %v1363 = vld [vmem:[%s168 + $0x67] sm:$0x1]
        %v1364 = vld [vmem:[%s168 + $0x77] sm:$0x1]
        %v1365 = vlaneseq
        %v1366 = vshrl.u32 %v1365, 7
        %v1367 = vsub.s32 7, %v1366
        %v1368 = vrot.slane %v670, %v1367
        %v1369 = vlaneseq
        %v1370 = vshrl.u32 %v1369, 7
        %v1371 = vsub.s32 7, %v1370
        %v1372 = vrot.slane %v673, %v1371
        %v1373 = vlaneseq
        %v1374 = vshrl.u32 %v1373, 7
        %v1375 = vsub.s32 7, %v1374
        %v1376 = vrot.slane %v676, %v1375
        %v1377 = vlaneseq
        %v1378 = vshrl.u32 %v1377, 7
        %v1379 = vsub.s32 7, %v1378
        %v1380 = vrot.slane %v679, %v1379
        %v1381 = vlaneseq
        %v1382 = vshrl.u32 %v1381, 7
        %v1383 = vsub.s32 7, %v1382
        %v1384 = vrot.slane %v682, %v1383
        %v1385 = vlaneseq
        %v1386 = vshrl.u32 %v1385, 7
        %v1387 = vsub.s32 7, %v1386
        %v1388 = vrot.slane %v685, %v1387
        %v1389 = vlaneseq
        %v1390 = vshrl.u32 %v1389, 7
        %v1391 = vsub.s32 7, %v1390
        %v1392 = vrot.slane %v688, %v1391
        %v1393 = vlaneseq
        %v1394 = vshrl.u32 %v1393, 7
        %v1395 = vsub.s32 7, %v1394
        %v1396 = vrot.slane %v691, %v1395
        %1405 = vset.pattern.permute.xlu0 0
        %1406 = vperm.xlu0 %1405, %v1368
        %v1407 = vpop.permute.xlu0 %1406
        %1408 = vset.pattern.permute.xlu0 0
        %1409 = vperm.xlu0 %1408, %v1372
        %v1410 = vpop.permute.xlu0 %1409
        %1411 = vset.pattern.permute.xlu0 0
        %1412 = vperm.xlu0 %1411, %v1376
        %v1413 = vpop.permute.xlu0 %1412
        %1414 = vset.pattern.permute.xlu0 0
        %1415 = vperm.xlu0 %1414, %v1380
        %v1416 = vpop.permute.xlu0 %1415
        %1417 = vset.pattern.permute.xlu0 0
        %1418 = vperm.xlu0 %1417, %v1384
        %v1419 = vpop.permute.xlu0 %1418
        %1420 = vset.pattern.permute.xlu0 0
        %1421 = vperm.xlu0 %1420, %v1388
        %v1422 = vpop.permute.xlu0 %1421
        %1423 = vset.pattern.permute.xlu0 0
        %1424 = vperm.xlu0 %1423, %v1392
        %v1425 = vpop.permute.xlu0 %1424
        %1426 = vset.pattern.permute.xlu0 0
        %1427 = vperm.xlu0 %1426, %v1396
        %v1428 = vpop.permute.xlu0 %1427
        %v1437 = vmul.f32 %v1357, %v1407
        %v1438 = vmul.f32 %v1358, %v1410
        %v1439 = vmul.f32 %v1359, %v1413
        %v1440 = vmul.f32 %v1360, %v1416
        %v1441 = vmul.f32 %v1361, %v1419
        %v1442 = vmul.f32 %v1362, %v1422
        %v1443 = vmul.f32 %v1363, %v1425
        %v1444 = vmul.f32 %v1364, %v1428
        %v1445 = vadd.f32 %v1349, %v1437
        %v1446 = vadd.f32 %v1350, %v1438
        %v1447 = vadd.f32 %v1351, %v1439
        %v1448 = vadd.f32 %v1352, %v1440
        %v1449 = vadd.f32 %v1353, %v1441
        %v1450 = vadd.f32 %v1354, %v1442
        %v1451 = vadd.f32 %v1355, %v1443
        %v1452 = vadd.f32 %v1356, %v1444
        %v1453 = vld [vmem:[%s168 + $0x8] sm:$0x1]
        %v1454 = vld [vmem:[%s168 + $0x18] sm:$0x1]
        %v1455 = vld [vmem:[%s168 + $0x28] sm:$0x1]
        %v1456 = vld [vmem:[%s168 + $0x38] sm:$0x1]
        %v1457 = vld [vmem:[%s168 + $0x48] sm:$0x1]
        %v1458 = vld [vmem:[%s168 + $0x58] sm:$0x1]
        %v1459 = vld [vmem:[%s168 + $0x68] sm:$0x1]
        %v1460 = vld [vmem:[%s168 + $0x78] sm:$0x1]
        %v1461 = vlaneseq
        %v1462 = vshrl.u32 %v1461, 7
        %v1463 = vsub.s32 0, %v1462
        %v1464 = vrot.slane %v671, %v1463
        %v1465 = vlaneseq
        %v1466 = vshrl.u32 %v1465, 7
        %v1467 = vsub.s32 0, %v1466
        %v1468 = vrot.slane %v674, %v1467
        %v1469 = vlaneseq
        %v1470 = vshrl.u32 %v1469, 7
        %v1471 = vsub.s32 0, %v1470
        %v1472 = vrot.slane %v677, %v1471
        %v1473 = vlaneseq
        %v1474 = vshrl.u32 %v1473, 7
        %v1475 = vsub.s32 0, %v1474
        %v1476 = vrot.slane %v680, %v1475
        %v1477 = vlaneseq
        %v1478 = vshrl.u32 %v1477, 7
        %v1479 = vsub.s32 0, %v1478
        %v1480 = vrot.slane %v683, %v1479
        %v1481 = vlaneseq
        %v1482 = vshrl.u32 %v1481, 7
        %v1483 = vsub.s32 0, %v1482
        %v1484 = vrot.slane %v686, %v1483
        %v1485 = vlaneseq
        %v1486 = vshrl.u32 %v1485, 7
        %v1487 = vsub.s32 0, %v1486
        %v1488 = vrot.slane %v689, %v1487
        %v1489 = vlaneseq
        %v1490 = vshrl.u32 %v1489, 7
        %v1491 = vsub.s32 0, %v1490
        %v1492 = vrot.slane %v692, %v1491
        %1501 = vset.pattern.permute.xlu0 0
        %1502 = vperm.xlu0 %1501, %v1464
        %v1503 = vpop.permute.xlu0 %1502
        %1504 = vset.pattern.permute.xlu0 0
        %1505 = vperm.xlu0 %1504, %v1468
        %v1506 = vpop.permute.xlu0 %1505
        %1507 = vset.pattern.permute.xlu0 0
        %1508 = vperm.xlu0 %1507, %v1472
        %v1509 = vpop.permute.xlu0 %1508
        %1510 = vset.pattern.permute.xlu0 0
        %1511 = vperm.xlu0 %1510, %v1476
        %v1512 = vpop.permute.xlu0 %1511
        %1513 = vset.pattern.permute.xlu0 0
        %1514 = vperm.xlu0 %1513, %v1480
        %v1515 = vpop.permute.xlu0 %1514
        %1516 = vset.pattern.permute.xlu0 0
        %1517 = vperm.xlu0 %1516, %v1484
        %v1518 = vpop.permute.xlu0 %1517
        %1519 = vset.pattern.permute.xlu0 0
        %1520 = vperm.xlu0 %1519, %v1488
        %v1521 = vpop.permute.xlu0 %1520
        %1522 = vset.pattern.permute.xlu0 0
        %1523 = vperm.xlu0 %1522, %v1492
        %v1524 = vpop.permute.xlu0 %1523
        %v1533 = vmul.f32 %v1453, %v1503
        %v1534 = vmul.f32 %v1454, %v1506
        %v1535 = vmul.f32 %v1455, %v1509
        %v1536 = vmul.f32 %v1456, %v1512
        %v1537 = vmul.f32 %v1457, %v1515
        %v1538 = vmul.f32 %v1458, %v1518
        %v1539 = vmul.f32 %v1459, %v1521
        %v1540 = vmul.f32 %v1460, %v1524
        %v1541 = vadd.f32 %v1445, %v1533
        %v1542 = vadd.f32 %v1446, %v1534
        %v1543 = vadd.f32 %v1447, %v1535
        %v1544 = vadd.f32 %v1448, %v1536
        %v1545 = vadd.f32 %v1449, %v1537
        %v1546 = vadd.f32 %v1450, %v1538
        %v1547 = vadd.f32 %v1451, %v1539
        %v1548 = vadd.f32 %v1452, %v1540
        %v1549 = vld [vmem:[%s168 + $0x9] sm:$0x1]
        %v1550 = vld [vmem:[%s168 + $0x19] sm:$0x1]
        %v1551 = vld [vmem:[%s168 + $0x29] sm:$0x1]
        %v1552 = vld [vmem:[%s168 + $0x39] sm:$0x1]
        %v1553 = vld [vmem:[%s168 + $0x49] sm:$0x1]
        %v1554 = vld [vmem:[%s168 + $0x59] sm:$0x1]
        %v1555 = vld [vmem:[%s168 + $0x69] sm:$0x1]
        %v1556 = vld [vmem:[%s168 + $0x79] sm:$0x1]
        %v1557 = vlaneseq
        %v1558 = vshrl.u32 %v1557, 7
        %v1559 = vsub.s32 1, %v1558
        %v1560 = vrot.slane %v671, %v1559
        %v1561 = vlaneseq
        %v1562 = vshrl.u32 %v1561, 7
        %v1563 = vsub.s32 1, %v1562
        %v1564 = vrot.slane %v674, %v1563
        %v1565 = vlaneseq
        %v1566 = vshrl.u32 %v1565, 7
        %v1567 = vsub.s32 1, %v1566
        %v1568 = vrot.slane %v677, %v1567
        %v1569 = vlaneseq
        %v1570 = vshrl.u32 %v1569, 7
        %v1571 = vsub.s32 1, %v1570
        %v1572 = vrot.slane %v680, %v1571
        %v1573 = vlaneseq
        %v1574 = vshrl.u32 %v1573, 7
        %v1575 = vsub.s32 1, %v1574
        %v1576 = vrot.slane %v683, %v1575
        %v1577 = vlaneseq
        %v1578 = vshrl.u32 %v1577, 7
        %v1579 = vsub.s32 1, %v1578
        %v1580 = vrot.slane %v686, %v1579
        %v1581 = vlaneseq
        %v1582 = vshrl.u32 %v1581, 7
        %v1583 = vsub.s32 1, %v1582
        %v1584 = vrot.slane %v689, %v1583
        %v1585 = vlaneseq
        %v1586 = vshrl.u32 %v1585, 7
        %v1587 = vsub.s32 1, %v1586
        %v1588 = vrot.slane %v692, %v1587
        %1597 = vset.pattern.permute.xlu0 0
        %1598 = vperm.xlu0 %1597, %v1560
        %v1599 = vpop.permute.xlu0 %1598
        %1600 = vset.pattern.permute.xlu0 0
        %1601 = vperm.xlu0 %1600, %v1564
        %v1602 = vpop.permute.xlu0 %1601
        %1603 = vset.pattern.permute.xlu0 0
        %1604 = vperm.xlu0 %1603, %v1568
        %v1605 = vpop.permute.xlu0 %1604
        %1606 = vset.pattern.permute.xlu0 0
        %1607 = vperm.xlu0 %1606, %v1572
        %v1608 = vpop.permute.xlu0 %1607
        %1609 = vset.pattern.permute.xlu0 0
        %1610 = vperm.xlu0 %1609, %v1576
        %v1611 = vpop.permute.xlu0 %1610
        %1612 = vset.pattern.permute.xlu0 0
        %1613 = vperm.xlu0 %1612, %v1580
        %v1614 = vpop.permute.xlu0 %1613
        %1615 = vset.pattern.permute.xlu0 0
        %1616 = vperm.xlu0 %1615, %v1584
        %v1617 = vpop.permute.xlu0 %1616
        %1618 = vset.pattern.permute.xlu0 0
        %1619 = vperm.xlu0 %1618, %v1588
        %v1620 = vpop.permute.xlu0 %1619
        %v1629 = vmul.f32 %v1549, %v1599
        %v1630 = vmul.f32 %v1550, %v1602
        %v1631 = vmul.f32 %v1551, %v1605
        %v1632 = vmul.f32 %v1552, %v1608
        %v1633 = vmul.f32 %v1553, %v1611
        %v1634 = vmul.f32 %v1554, %v1614
        %v1635 = vmul.f32 %v1555, %v1617
        %v1636 = vmul.f32 %v1556, %v1620
        %v1637 = vadd.f32 %v1541, %v1629
        %v1638 = vadd.f32 %v1542, %v1630
        %v1639 = vadd.f32 %v1543, %v1631
        %v1640 = vadd.f32 %v1544, %v1632
        %v1641 = vadd.f32 %v1545, %v1633
        %v1642 = vadd.f32 %v1546, %v1634
        %v1643 = vadd.f32 %v1547, %v1635
        %v1644 = vadd.f32 %v1548, %v1636
        %v1645 = vld [vmem:[%s168 + $0xa] sm:$0x1]
        %v1646 = vld [vmem:[%s168 + $0x1a] sm:$0x1]
        %v1647 = vld [vmem:[%s168 + $0x2a] sm:$0x1]
        %v1648 = vld [vmem:[%s168 + $0x3a] sm:$0x1]
        %v1649 = vld [vmem:[%s168 + $0x4a] sm:$0x1]
        %v1650 = vld [vmem:[%s168 + $0x5a] sm:$0x1]
        %v1651 = vld [vmem:[%s168 + $0x6a] sm:$0x1]
        %v1652 = vld [vmem:[%s168 + $0x7a] sm:$0x1]
        %v1653 = vlaneseq
        %v1654 = vshrl.u32 %v1653, 7
        %v1655 = vsub.s32 2, %v1654
        %v1656 = vrot.slane %v671, %v1655
        %v1657 = vlaneseq
        %v1658 = vshrl.u32 %v1657, 7
        %v1659 = vsub.s32 2, %v1658
        %v1660 = vrot.slane %v674, %v1659
        %v1661 = vlaneseq
        %v1662 = vshrl.u32 %v1661, 7
        %v1663 = vsub.s32 2, %v1662
        %v1664 = vrot.slane %v677, %v1663
        %v1665 = vlaneseq
        %v1666 = vshrl.u32 %v1665, 7
        %v1667 = vsub.s32 2, %v1666
        %v1668 = vrot.slane %v680, %v1667
        %v1669 = vlaneseq
        %v1670 = vshrl.u32 %v1669, 7
        %v1671 = vsub.s32 2, %v1670
        %v1672 = vrot.slane %v683, %v1671
        %v1673 = vlaneseq
        %v1674 = vshrl.u32 %v1673, 7
        %v1675 = vsub.s32 2, %v1674
        %v1676 = vrot.slane %v686, %v1675
        %v1677 = vlaneseq
        %v1678 = vshrl.u32 %v1677, 7
        %v1679 = vsub.s32 2, %v1678
        %v1680 = vrot.slane %v689, %v1679
        %v1681 = vlaneseq
        %v1682 = vshrl.u32 %v1681, 7
        %v1683 = vsub.s32 2, %v1682
        %v1684 = vrot.slane %v692, %v1683
        %1693 = vset.pattern.permute.xlu0 0
        %1694 = vperm.xlu0 %1693, %v1656
        %v1695 = vpop.permute.xlu0 %1694
        %1696 = vset.pattern.permute.xlu0 0
        %1697 = vperm.xlu0 %1696, %v1660
        %v1698 = vpop.permute.xlu0 %1697
        %1699 = vset.pattern.permute.xlu0 0
        %1700 = vperm.xlu0 %1699, %v1664
        %v1701 = vpop.permute.xlu0 %1700
        %1702 = vset.pattern.permute.xlu0 0
        %1703 = vperm.xlu0 %1702, %v1668
        %v1704 = vpop.permute.xlu0 %1703
        %1705 = vset.pattern.permute.xlu0 0
        %1706 = vperm.xlu0 %1705, %v1672
        %v1707 = vpop.permute.xlu0 %1706
        %1708 = vset.pattern.permute.xlu0 0
        %1709 = vperm.xlu0 %1708, %v1676
        %v1710 = vpop.permute.xlu0 %1709
        %1711 = vset.pattern.permute.xlu0 0
        %1712 = vperm.xlu0 %1711, %v1680
        %v1713 = vpop.permute.xlu0 %1712
        %1714 = vset.pattern.permute.xlu0 0
        %1715 = vperm.xlu0 %1714, %v1684
        %v1716 = vpop.permute.xlu0 %1715
        %v1725 = vmul.f32 %v1645, %v1695
        %v1726 = vmul.f32 %v1646, %v1698
        %v1727 = vmul.f32 %v1647, %v1701
        %v1728 = vmul.f32 %v1648, %v1704
        %v1729 = vmul.f32 %v1649, %v1707
        %v1730 = vmul.f32 %v1650, %v1710
        %v1731 = vmul.f32 %v1651, %v1713
        %v1732 = vmul.f32 %v1652, %v1716
        %v1733 = vadd.f32 %v1637, %v1725
        %v1734 = vadd.f32 %v1638, %v1726
        %v1735 = vadd.f32 %v1639, %v1727
        %v1736 = vadd.f32 %v1640, %v1728
        %v1737 = vadd.f32 %v1641, %v1729
        %v1738 = vadd.f32 %v1642, %v1730
        %v1739 = vadd.f32 %v1643, %v1731
        %v1740 = vadd.f32 %v1644, %v1732
        %v1741 = vld [vmem:[%s168 + $0xb] sm:$0x1]
        %v1742 = vld [vmem:[%s168 + $0x1b] sm:$0x1]
        %v1743 = vld [vmem:[%s168 + $0x2b] sm:$0x1]
        %v1744 = vld [vmem:[%s168 + $0x3b] sm:$0x1]
        %v1745 = vld [vmem:[%s168 + $0x4b] sm:$0x1]
        %v1746 = vld [vmem:[%s168 + $0x5b] sm:$0x1]
        %v1747 = vld [vmem:[%s168 + $0x6b] sm:$0x1]
        %v1748 = vld [vmem:[%s168 + $0x7b] sm:$0x1]
        %v1749 = vlaneseq
        %v1750 = vshrl.u32 %v1749, 7
        %v1751 = vsub.s32 3, %v1750
        %v1752 = vrot.slane %v671, %v1751
        %v1753 = vlaneseq
        %v1754 = vshrl.u32 %v1753, 7
        %v1755 = vsub.s32 3, %v1754
        %v1756 = vrot.slane %v674, %v1755
        %v1757 = vlaneseq
        %v1758 = vshrl.u32 %v1757, 7
        %v1759 = vsub.s32 3, %v1758
        %v1760 = vrot.slane %v677, %v1759
        %v1761 = vlaneseq
        %v1762 = vshrl.u32 %v1761, 7
        %v1763 = vsub.s32 3, %v1762
        %v1764 = vrot.slane %v680, %v1763
        %v1765 = vlaneseq
        %v1766 = vshrl.u32 %v1765, 7
        %v1767 = vsub.s32 3, %v1766
        %v1768 = vrot.slane %v683, %v1767
        %v1769 = vlaneseq
        %v1770 = vshrl.u32 %v1769, 7
        %v1771 = vsub.s32 3, %v1770
        %v1772 = vrot.slane %v686, %v1771
        %v1773 = vlaneseq
        %v1774 = vshrl.u32 %v1773, 7
        %v1775 = vsub.s32 3, %v1774
        %v1776 = vrot.slane %v689, %v1775
        %v1777 = vlaneseq
        %v1778 = vshrl.u32 %v1777, 7
        %v1779 = vsub.s32 3, %v1778
        %v1780 = vrot.slane %v692, %v1779
        %1789 = vset.pattern.permute.xlu0 0
        %1790 = vperm.xlu0 %1789, %v1752
        %v1791 = vpop.permute.xlu0 %1790
        %1792 = vset.pattern.permute.xlu0 0
        %1793 = vperm.xlu0 %1792, %v1756
        %v1794 = vpop.permute.xlu0 %1793
        %1795 = vset.pattern.permute.xlu0 0
        %1796 = vperm.xlu0 %1795, %v1760
        %v1797 = vpop.permute.xlu0 %1796
        %1798 = vset.pattern.permute.xlu0 0
        %1799 = vperm.xlu0 %1798, %v1764
        %v1800 = vpop.permute.xlu0 %1799
        %1801 = vset.pattern.permute.xlu0 0
        %1802 = vperm.xlu0 %1801, %v1768
        %v1803 = vpop.permute.xlu0 %1802
        %1804 = vset.pattern.permute.xlu0 0
        %1805 = vperm.xlu0 %1804, %v1772
        %v1806 = vpop.permute.xlu0 %1805
        %1807 = vset.pattern.permute.xlu0 0
        %1808 = vperm.xlu0 %1807, %v1776
        %v1809 = vpop.permute.xlu0 %1808
        %1810 = vset.pattern.permute.xlu0 0
        %1811 = vperm.xlu0 %1810, %v1780
        %v1812 = vpop.permute.xlu0 %1811
        %v1821 = vmul.f32 %v1741, %v1791
        %v1822 = vmul.f32 %v1742, %v1794
        %v1823 = vmul.f32 %v1743, %v1797
        %v1824 = vmul.f32 %v1744, %v1800
        %v1825 = vmul.f32 %v1745, %v1803
        %v1826 = vmul.f32 %v1746, %v1806
        %v1827 = vmul.f32 %v1747, %v1809
        %v1828 = vmul.f32 %v1748, %v1812
        %v1829 = vadd.f32 %v1733, %v1821
        %v1830 = vadd.f32 %v1734, %v1822
        %v1831 = vadd.f32 %v1735, %v1823
        %v1832 = vadd.f32 %v1736, %v1824
        %v1833 = vadd.f32 %v1737, %v1825
        %v1834 = vadd.f32 %v1738, %v1826
        %v1835 = vadd.f32 %v1739, %v1827
        %v1836 = vadd.f32 %v1740, %v1828
        %v1837 = vld [vmem:[%s168 + $0xc] sm:$0x1]
        %v1838 = vld [vmem:[%s168 + $0x1c] sm:$0x1]
        %v1839 = vld [vmem:[%s168 + $0x2c] sm:$0x1]
        %v1840 = vld [vmem:[%s168 + $0x3c] sm:$0x1]
        %v1841 = vld [vmem:[%s168 + $0x4c] sm:$0x1]
        %v1842 = vld [vmem:[%s168 + $0x5c] sm:$0x1]
        %v1843 = vld [vmem:[%s168 + $0x6c] sm:$0x1]
        %v1844 = vld [vmem:[%s168 + $0x7c] sm:$0x1]
        %v1845 = vlaneseq
        %v1846 = vshrl.u32 %v1845, 7
        %v1847 = vsub.s32 4, %v1846
        %v1848 = vrot.slane %v671, %v1847
        %v1849 = vlaneseq
        %v1850 = vshrl.u32 %v1849, 7
        %v1851 = vsub.s32 4, %v1850
        %v1852 = vrot.slane %v674, %v1851
        %v1853 = vlaneseq
        %v1854 = vshrl.u32 %v1853, 7
        %v1855 = vsub.s32 4, %v1854
        %v1856 = vrot.slane %v677, %v1855
        %v1857 = vlaneseq
        %v1858 = vshrl.u32 %v1857, 7
        %v1859 = vsub.s32 4, %v1858
        %v1860 = vrot.slane %v680, %v1859
        %v1861 = vlaneseq
        %v1862 = vshrl.u32 %v1861, 7
        %v1863 = vsub.s32 4, %v1862
        %v1864 = vrot.slane %v683, %v1863
        %v1865 = vlaneseq
        %v1866 = vshrl.u32 %v1865, 7
        %v1867 = vsub.s32 4, %v1866
        %v1868 = vrot.slane %v686, %v1867
        %v1869 = vlaneseq
        %v1870 = vshrl.u32 %v1869, 7
        %v1871 = vsub.s32 4, %v1870
        %v1872 = vrot.slane %v689, %v1871
        %v1873 = vlaneseq
        %v1874 = vshrl.u32 %v1873, 7
        %v1875 = vsub.s32 4, %v1874
        %v1876 = vrot.slane %v692, %v1875
        %1885 = vset.pattern.permute.xlu0 0
        %1886 = vperm.xlu0 %1885, %v1848
        %v1887 = vpop.permute.xlu0 %1886
        %1888 = vset.pattern.permute.xlu0 0
        %1889 = vperm.xlu0 %1888, %v1852
        %v1890 = vpop.permute.xlu0 %1889
        %1891 = vset.pattern.permute.xlu0 0
        %1892 = vperm.xlu0 %1891, %v1856
        %v1893 = vpop.permute.xlu0 %1892
        %1894 = vset.pattern.permute.xlu0 0
        %1895 = vperm.xlu0 %1894, %v1860
        %v1896 = vpop.permute.xlu0 %1895
        %1897 = vset.pattern.permute.xlu0 0
        %1898 = vperm.xlu0 %1897, %v1864
        %v1899 = vpop.permute.xlu0 %1898
        %1900 = vset.pattern.permute.xlu0 0
        %1901 = vperm.xlu0 %1900, %v1868
        %v1902 = vpop.permute.xlu0 %1901
        %1903 = vset.pattern.permute.xlu0 0
        %1904 = vperm.xlu0 %1903, %v1872
        %v1905 = vpop.permute.xlu0 %1904
        %1906 = vset.pattern.permute.xlu0 0
        %1907 = vperm.xlu0 %1906, %v1876
        %v1908 = vpop.permute.xlu0 %1907
        %v1917 = vmul.f32 %v1837, %v1887
        %v1918 = vmul.f32 %v1838, %v1890
        %v1919 = vmul.f32 %v1839, %v1893
        %v1920 = vmul.f32 %v1840, %v1896
        %v1921 = vmul.f32 %v1841, %v1899
        %v1922 = vmul.f32 %v1842, %v1902
        %v1923 = vmul.f32 %v1843, %v1905
        %v1924 = vmul.f32 %v1844, %v1908
        %v1925 = vadd.f32 %v1829, %v1917
        %v1926 = vadd.f32 %v1830, %v1918
        %v1927 = vadd.f32 %v1831, %v1919
        %v1928 = vadd.f32 %v1832, %v1920
        %v1929 = vadd.f32 %v1833, %v1921
        %v1930 = vadd.f32 %v1834, %v1922
        %v1931 = vadd.f32 %v1835, %v1923
        %v1932 = vadd.f32 %v1836, %v1924
        %v1933 = vld [vmem:[%s168 + $0xd] sm:$0x1]
        %v1934 = vld [vmem:[%s168 + $0x1d] sm:$0x1]
        %v1935 = vld [vmem:[%s168 + $0x2d] sm:$0x1]
        %v1936 = vld [vmem:[%s168 + $0x3d] sm:$0x1]
        %v1937 = vld [vmem:[%s168 + $0x4d] sm:$0x1]
        %v1938 = vld [vmem:[%s168 + $0x5d] sm:$0x1]
        %v1939 = vld [vmem:[%s168 + $0x6d] sm:$0x1]
        %v1940 = vld [vmem:[%s168 + $0x7d] sm:$0x1]
        %v1941 = vlaneseq
        %v1942 = vshrl.u32 %v1941, 7
        %v1943 = vsub.s32 5, %v1942
        %v1944 = vrot.slane %v671, %v1943
        %v1945 = vlaneseq
        %v1946 = vshrl.u32 %v1945, 7
        %v1947 = vsub.s32 5, %v1946
        %v1948 = vrot.slane %v674, %v1947
        %v1949 = vlaneseq
        %v1950 = vshrl.u32 %v1949, 7
        %v1951 = vsub.s32 5, %v1950
        %v1952 = vrot.slane %v677, %v1951
        %v1953 = vlaneseq
        %v1954 = vshrl.u32 %v1953, 7
        %v1955 = vsub.s32 5, %v1954
        %v1956 = vrot.slane %v680, %v1955
        %v1957 = vlaneseq
        %v1958 = vshrl.u32 %v1957, 7
        %v1959 = vsub.s32 5, %v1958
        %v1960 = vrot.slane %v683, %v1959
        %v1961 = vlaneseq
        %v1962 = vshrl.u32 %v1961, 7
        %v1963 = vsub.s32 5, %v1962
        %v1964 = vrot.slane %v686, %v1963
        %v1965 = vlaneseq
        %v1966 = vshrl.u32 %v1965, 7
        %v1967 = vsub.s32 5, %v1966
        %v1968 = vrot.slane %v689, %v1967
        %v1969 = vlaneseq
        %v1970 = vshrl.u32 %v1969, 7
        %v1971 = vsub.s32 5, %v1970
        %v1972 = vrot.slane %v692, %v1971
        %1981 = vset.pattern.permute.xlu0 0
        %1982 = vperm.xlu0 %1981, %v1944
        %v1983 = vpop.permute.xlu0 %1982
        %1984 = vset.pattern.permute.xlu0 0
        %1985 = vperm.xlu0 %1984, %v1948
        %v1986 = vpop.permute.xlu0 %1985
        %1987 = vset.pattern.permute.xlu0 0
        %1988 = vperm.xlu0 %1987, %v1952
        %v1989 = vpop.permute.xlu0 %1988
        %1990 = vset.pattern.permute.xlu0 0
        %1991 = vperm.xlu0 %1990, %v1956
        %v1992 = vpop.permute.xlu0 %1991
        %1993 = vset.pattern.permute.xlu0 0
        %1994 = vperm.xlu0 %1993, %v1960
        %v1995 = vpop.permute.xlu0 %1994
        %1996 = vset.pattern.permute.xlu0 0
        %1997 = vperm.xlu0 %1996, %v1964
        %v1998 = vpop.permute.xlu0 %1997
        %1999 = vset.pattern.permute.xlu0 0
        %2000 = vperm.xlu0 %1999, %v1968
        %v2001 = vpop.permute.xlu0 %2000
        %2002 = vset.pattern.permute.xlu0 0
        %2003 = vperm.xlu0 %2002, %v1972
        %v2004 = vpop.permute.xlu0 %2003
        %v2013 = vmul.f32 %v1933, %v1983
        %v2014 = vmul.f32 %v1934, %v1986
        %v2015 = vmul.f32 %v1935, %v1989
        %v2016 = vmul.f32 %v1936, %v1992
        %v2017 = vmul.f32 %v1937, %v1995
        %v2018 = vmul.f32 %v1938, %v1998
        %v2019 = vmul.f32 %v1939, %v2001
        %v2020 = vmul.f32 %v1940, %v2004
        %v2021 = vadd.f32 %v1925, %v2013
        %v2022 = vadd.f32 %v1926, %v2014
        %v2023 = vadd.f32 %v1927, %v2015
        %v2024 = vadd.f32 %v1928, %v2016
        %v2025 = vadd.f32 %v1929, %v2017
        %v2026 = vadd.f32 %v1930, %v2018
        %v2027 = vadd.f32 %v1931, %v2019
        %v2028 = vadd.f32 %v1932, %v2020
        %v2029 = vld [vmem:[%s168 + $0xe] sm:$0x1]
        %v2030 = vld [vmem:[%s168 + $0x1e] sm:$0x1]
        %v2031 = vld [vmem:[%s168 + $0x2e] sm:$0x1]
        %v2032 = vld [vmem:[%s168 + $0x3e] sm:$0x1]
        %v2033 = vld [vmem:[%s168 + $0x4e] sm:$0x1]
        %v2034 = vld [vmem:[%s168 + $0x5e] sm:$0x1]
        %v2035 = vld [vmem:[%s168 + $0x6e] sm:$0x1]
        %v2036 = vld [vmem:[%s168 + $0x7e] sm:$0x1]
        %v2037 = vlaneseq
        %v2038 = vshrl.u32 %v2037, 7
        %v2039 = vsub.s32 6, %v2038
        %v2040 = vrot.slane %v671, %v2039
        %v2041 = vlaneseq
        %v2042 = vshrl.u32 %v2041, 7
        %v2043 = vsub.s32 6, %v2042
        %v2044 = vrot.slane %v674, %v2043
        %v2045 = vlaneseq
        %v2046 = vshrl.u32 %v2045, 7
        %v2047 = vsub.s32 6, %v2046
        %v2048 = vrot.slane %v677, %v2047
        %v2049 = vlaneseq
        %v2050 = vshrl.u32 %v2049, 7
        %v2051 = vsub.s32 6, %v2050
        %v2052 = vrot.slane %v680, %v2051
        %v2053 = vlaneseq
        %v2054 = vshrl.u32 %v2053, 7
        %v2055 = vsub.s32 6, %v2054
        %v2056 = vrot.slane %v683, %v2055
        %v2057 = vlaneseq
        %v2058 = vshrl.u32 %v2057, 7
        %v2059 = vsub.s32 6, %v2058
        %v2060 = vrot.slane %v686, %v2059
        %v2061 = vlaneseq
        %v2062 = vshrl.u32 %v2061, 7
        %v2063 = vsub.s32 6, %v2062
        %v2064 = vrot.slane %v689, %v2063
        %v2065 = vlaneseq
        %v2066 = vshrl.u32 %v2065, 7
        %v2067 = vsub.s32 6, %v2066
        %v2068 = vrot.slane %v692, %v2067
        %2077 = vset.pattern.permute.xlu0 0
        %2078 = vperm.xlu0 %2077, %v2040
        %v2079 = vpop.permute.xlu0 %2078
        %2080 = vset.pattern.permute.xlu0 0
        %2081 = vperm.xlu0 %2080, %v2044
        %v2082 = vpop.permute.xlu0 %2081
        %2083 = vset.pattern.permute.xlu0 0
        %2084 = vperm.xlu0 %2083, %v2048
        %v2085 = vpop.permute.xlu0 %2084
        %2086 = vset.pattern.permute.xlu0 0
        %2087 = vperm.xlu0 %2086, %v2052
        %v2088 = vpop.permute.xlu0 %2087
        %2089 = vset.pattern.permute.xlu0 0
        %2090 = vperm.xlu0 %2089, %v2056
        %v2091 = vpop.permute.xlu0 %2090
        %2092 = vset.pattern.permute.xlu0 0
        %2093 = vperm.xlu0 %2092, %v2060
        %v2094 = vpop.permute.xlu0 %2093
        %2095 = vset.pattern.permute.xlu0 0
        %2096 = vperm.xlu0 %2095, %v2064
        %v2097 = vpop.permute.xlu0 %2096
        %2098 = vset.pattern.permute.xlu0 0
        %2099 = vperm.xlu0 %2098, %v2068
        %v2100 = vpop.permute.xlu0 %2099
        %v2109 = vmul.f32 %v2029, %v2079
        %v2110 = vmul.f32 %v2030, %v2082
        %v2111 = vmul.f32 %v2031, %v2085
        %v2112 = vmul.f32 %v2032, %v2088
        %v2113 = vmul.f32 %v2033, %v2091
        %v2114 = vmul.f32 %v2034, %v2094
        %v2115 = vmul.f32 %v2035, %v2097
        %v2116 = vmul.f32 %v2036, %v2100
        %v2117 = vadd.f32 %v2021, %v2109
        %v2118 = vadd.f32 %v2022, %v2110
        %v2119 = vadd.f32 %v2023, %v2111
        %v2120 = vadd.f32 %v2024, %v2112
        %v2121 = vadd.f32 %v2025, %v2113
        %v2122 = vadd.f32 %v2026, %v2114
        %v2123 = vadd.f32 %v2027, %v2115
        %v2124 = vadd.f32 %v2028, %v2116
        %v2125 = vld [vmem:[%s168 + $0xf] sm:$0x1]
        %v2126 = vld [vmem:[%s168 + $0x1f] sm:$0x1]
        %v2127 = vld [vmem:[%s168 + $0x2f] sm:$0x1]
        %v2128 = vld [vmem:[%s168 + $0x3f] sm:$0x1]
        %v2129 = vld [vmem:[%s168 + $0x4f] sm:$0x1]
        %v2130 = vld [vmem:[%s168 + $0x5f] sm:$0x1]
        %v2131 = vld [vmem:[%s168 + $0x6f] sm:$0x1]
        %v2132 = vld [vmem:[%s168 + $0x7f] sm:$0x1]
        %v2133 = vlaneseq
        %v2134 = vshrl.u32 %v2133, 7
        %v2135 = vsub.s32 7, %v2134
        %v2136 = vrot.slane %v671, %v2135
        %v2137 = vlaneseq
        %v2138 = vshrl.u32 %v2137, 7
        %v2139 = vsub.s32 7, %v2138
        %v2140 = vrot.slane %v674, %v2139
        %v2141 = vlaneseq
        %v2142 = vshrl.u32 %v2141, 7
        %v2143 = vsub.s32 7, %v2142
        %v2144 = vrot.slane %v677, %v2143
        %v2145 = vlaneseq
        %v2146 = vshrl.u32 %v2145, 7
        %v2147 = vsub.s32 7, %v2146
        %v2148 = vrot.slane %v680, %v2147
        %v2149 = vlaneseq
        %v2150 = vshrl.u32 %v2149, 7
        %v2151 = vsub.s32 7, %v2150
        %v2152 = vrot.slane %v683, %v2151
        %v2153 = vlaneseq
        %v2154 = vshrl.u32 %v2153, 7
        %v2155 = vsub.s32 7, %v2154
        %v2156 = vrot.slane %v686, %v2155
        %v2157 = vlaneseq
        %v2158 = vshrl.u32 %v2157, 7
        %v2159 = vsub.s32 7, %v2158
        %v2160 = vrot.slane %v689, %v2159
        %v2161 = vlaneseq
        %v2162 = vshrl.u32 %v2161, 7
        %v2163 = vsub.s32 7, %v2162
        %v2164 = vrot.slane %v692, %v2163
        %2173 = vset.pattern.permute.xlu0 0
        %2174 = vperm.xlu0 %2173, %v2136
        %v2175 = vpop.permute.xlu0 %2174
        %2176 = vset.pattern.permute.xlu0 0
        %2177 = vperm.xlu0 %2176, %v2140
        %v2178 = vpop.permute.xlu0 %2177
        %2179 = vset.pattern.permute.xlu0 0
        %2180 = vperm.xlu0 %2179, %v2144
        %v2181 = vpop.permute.xlu0 %2180
        %2182 = vset.pattern.permute.xlu0 0
        %2183 = vperm.xlu0 %2182, %v2148
        %v2184 = vpop.permute.xlu0 %2183
        %2185 = vset.pattern.permute.xlu0 0
        %2186 = vperm.xlu0 %2185, %v2152
        %v2187 = vpop.permute.xlu0 %2186
        %2188 = vset.pattern.permute.xlu0 0
        %2189 = vperm.xlu0 %2188, %v2156
        %v2190 = vpop.permute.xlu0 %2189
        %2191 = vset.pattern.permute.xlu0 0
        %2192 = vperm.xlu0 %2191, %v2160
        %v2193 = vpop.permute.xlu0 %2192
        %2194 = vset.pattern.permute.xlu0 0
        %2195 = vperm.xlu0 %2194, %v2164
        %v2196 = vpop.permute.xlu0 %2195
        %v2205 = vmul.f32 %v2125, %v2175
        %v2206 = vmul.f32 %v2126, %v2178
        %v2207 = vmul.f32 %v2127, %v2181
        %v2208 = vmul.f32 %v2128, %v2184
        %v2209 = vmul.f32 %v2129, %v2187
        %v2210 = vmul.f32 %v2130, %v2190
        %v2211 = vmul.f32 %v2131, %v2193
        %v2212 = vmul.f32 %v2132, %v2196
        %v2213 = vadd.f32 %v2117, %v2205
        %v2214 = vadd.f32 %v2118, %v2206
        %v2215 = vadd.f32 %v2119, %v2207
        %v2216 = vadd.f32 %v2120, %v2208
        %v2217 = vadd.f32 %v2121, %v2209
        %v2218 = vadd.f32 %v2122, %v2210
        %v2219 = vadd.f32 %v2123, %v2211
        %v2220 = vadd.f32 %v2124, %v2212
        %v2229 = vrot.slane %v2214, 7
        %v2230 = vsel %vm373, %v2229, %v2213
        %v2231 = vrot.slane %v2215, 6
        %v2232 = vsel %vm375, %v2231, %v2230
        %v2233 = vrot.slane %v2216, 5
        %v2234 = vsel %vm377, %v2233, %v2232
        %v2235 = vrot.slane %v2217, 4
        %v2236 = vsel %vm379, %v2235, %v2234
        %v2237 = vrot.slane %v2218, 3
        %v2238 = vsel %vm381, %v2237, %v2236
        %v2239 = vrot.slane %v2219, 2
        %v2240 = vsel %vm383, %v2239, %v2238
        %v2241 = vrot.slane %v2220, 1
        %v2242 = vsel %vm385, %v2241, %v2240
        %2244 = vst [vmem:[%s190] sm:$0xff] %v2242
        %s2245 = sand.u32 %s97, 1
        %s2246 = scalar_lea.sflag [#allocation5], %s2245
        %s2247 = sand.u32 %s97, 1
        %s2248 = smul.addr %s2247, 8
        %s2249 = scalar_lea.vmem [#allocation6], %s2248
        // Predicated region
        $region37: #{tpu_custom_call.1} parent=31 // pred_check
          %p2250 = pneg %p107
        $region38: #{tpu_custom_call.1} parent=31 // pred_check_branch
          %2252 = sbr.rel (%p2250) target = $region40
        $region39: #{tpu_custom_call.1} parent=31 // pred_region
          %s2254 = ssub.s32 128, 128
          %2255 = vsyncadd %s2246, %s2254
          %s2256 = smul.addr %s21, 128
          %s2257 = scalar_lea.hbm %s3, %s2256
          %s2259 = sshll.u32 %s2249, 4
          %s2260 = int_to_ptr.vmem [resolvable:$true] %s2259
          %2262 = dma.vmem_to_hbm [thread:$0]  %s2260, 128, %s2257, %s2246
        $region40: #{tpu_custom_call.1} parent=31 // pred_fallthru
          _
      $region32: #{tpu_custom_call.1} parent=5 // pred_fallthru
        _
      %p2263 = scmp.le.s32.totalorder 2, %s16
      // Predicated region
      $region41: #{tpu_custom_call.1} parent=5 // pred_check
        %p2264 = pneg %p2263
      $region42: #{tpu_custom_call.1} parent=5 // pred_check_branch
        %2266 = sbr.rel (%p2264) target = $region44
      $region43: #{tpu_custom_call.1} parent=5 // pred_region
        %s2267 = ssub.s32 %s16, 2
        // Predicated region
        $region45: #{tpu_custom_call.1} parent=43 // pred_check
          %p2268 = pneg %p113
        $region46: #{tpu_custom_call.1} parent=43 // pred_check_branch
          %2270 = sbr.rel (%p2268) target = $region48
        $region47: #{tpu_custom_call.1} parent=43 // pred_region
          %s2271 = sand.u32 %s98, 1
          %s2272 = scalar_lea.sflag [#allocation5], %s2271
          %s2273 = sand.u32 %s98, 1
          %s2274 = smul.addr %s2273, 8
          %s2275 = scalar_lea.vmem [#allocation6], %s2274
          %2276 = dma.done %s2272, 128
        $region48: #{tpu_custom_call.1} parent=43 // pred_fallthru
          _
      $region44: #{tpu_custom_call.1} parent=5 // pred_fallthru
        _
    $region6: #{tpu_custom_call.1} parent=1 // loop_footer
      %s20 = sadd.s32 1, %s16
    $region7: #{tpu_custom_call.1} parent=1 // loop_footer_branch
      %15 = sbr.rel target = $region3
    $region8: #{tpu_custom_call.1} parent=1 // loop_exit
      _
    %2277 = vsyncpa [#allocation4], 1
    %s2278 = scalar_lea.sflag [#allocation4], 1
    %2279 = vsyncpa %s2278, 1
    %2280 = vsyncpa [#allocation5], 1
    %s2281 = scalar_lea.sflag [#allocation5], 1
    %2282 = vsyncpa %s2281, 1

</llo_original>
